<compile_context>
chip_gen: v7x
topology: tpu7x:2x2x1
jax: 0.10.0
libtpu: 0.0.40
codegen_flags: <defaults>
</compile_context>

<pallas_src>
import functools

import jax
import jax.numpy as jnp
import numpy as np
from jax.experimental import pallas as pl
from jax.experimental.pallas import tpu as pltpu


# ----------------------------------------------------------------------------
# Bilinear 2x upsample matrix, align_corners=False (PyTorch nn.Upsample).
# ----------------------------------------------------------------------------
def _up2x_matrix(n: int) -> np.ndarray:
    """(2n, n) interpolation matrix for 2x bilinear, half-pixel centers, edge clamp."""
    a = np.zeros((2 * n, n), dtype=np.float32)
    for k in range(n):
        # out[2k]   -> src = k - 0.25 : 0.25*in[k-1] + 0.75*in[k]   (clamped)
        a[2 * k, max(k - 1, 0)] += 0.25
        a[2 * k, k] += 0.75
        # out[2k+1] -> src = k + 0.25 : 0.75*in[k]  + 0.25*in[k+1]  (clamped)
        a[2 * k + 1, k] += 0.75
        a[2 * k + 1, min(k + 1, n - 1)] += 0.25
    return a


# ----------------------------------------------------------------------------
# Generation-aware VMEM budget and column-tile selection.
# ----------------------------------------------------------------------------
def _vmem_budget_bytes() -> int:
    cap = None
    try:
        info = pltpu.get_tpu_info()
        cap = int(getattr(info, "vmem_capacity_bytes", 0) or 0) or None
    except Exception:  # pragma: no cover - info query unavailable
        cap = None
    if cap is None:
        return 48 * 1024 * 1024  # conservative: fits v5e / v6e / v7x
    # Leave headroom for compiler scratch; cap so v6e/v5e don't over-request.
    return min(int(cap * 0.6), 96 * 1024 * 1024)


def _vmem_bytes_for_tile(cout, c2, h, w_in, tc) -> int:
    """Rough per-grid-step VMEM estimate (double-buffered blocks + live f32)."""
    h2 = 2 * h
    f32, bf16 = 4, 2
    y_blk = cout * h * w_in * f32
    awt_blk = w_in * tc * f32
    ah_blk = h2 * h * f32
    res_blk = c2 * h2 * tc * bf16
    out_blk = cout * h2 * tc * bf16
    pipelined = 2 * (y_blk + awt_blk + ah_blk + res_blk + out_blk)
    live = (cout * h * tc + 4 * h2 * tc + c2 * h2 * tc) * f32  # z / acc / upcast res
    return pipelined + live


def _pick_col_tile(batch, w_out, cout, c2, h, w_in, budget) -> int:
    """Largest column tile of the 2W axis that fits the VMEM budget.

    Candidates: the full extent plus every multiple of 128 dividing 2W.
    Fails loudly (no silent full-extent fallback) if nothing fits.
    """
    cands = {w_out}
    t = 128
    while t < w_out:
        if w_out % t == 0:
            cands.add(t)
        t += 128
    fitting = sorted(
        (t for t in cands if _vmem_bytes_for_tile(cout, c2, h, w_in, t) <= budget),
        reverse=True)
    if not fitting:
        raise ValueError(
            f"MCUp tile selection: no column tile of the ({2 * h}, {w_out}) output "
            f"fits the VMEM budget of {budget} bytes; add output-row tiling for "
            f"feature maps this large.")
    tile = fitting[0]
    # v7x has 2 TensorCores: if the batch axis alone cannot be sharded, prefer
    # >= 2 column tiles so both cores get work (no-op on v5e/v6e single TC).
    if batch == 1 and tile == w_out:
        halves = [t for t in fitting if t <= w_out // 2]
        if halves:
            tile = halves[0]
    return tile


# ----------------------------------------------------------------------------
# Fused MCUp layer kernel (per grid step (batch i, column tile j)):
#   z       = Y_i @ Aw^T[:, j-tile]                (one MXU matmul, M = COUT*H)
#   per c:  o[c] = Ah @ z[c] + sum_k W2[c,k]*res[k] + b[c]
# ----------------------------------------------------------------------------
def _mcup_kernel(cout, c2, h, y_ref, res_ref, awt_ref, ah_ref, w2_ref, b_ref, o_ref):
    # y_ref:   (1, COUT*H, W)    f32   Y = W1 @ x with channels folded into rows
    # res_ref: (1, C2, 2H, TC)   bf16  column slice of the high-res residual
    # awt_ref: (W, TC)           f32   column slice of Aw^T
    # ah_ref:  (2H, H)           f32
    # w2_ref:  (COUT, C2)        f32   SMEM
    # b_ref:   (COUT,)           f32   SMEM
    # o_ref:   (1, COUT, 2H, TC) bf16
    z = jnp.dot(y_ref[0], awt_ref[...], preferred_element_type=jnp.float32)
    ah = ah_ref[...]
    for c in range(cout):  # COUT is small & static -> fully unrolled
        # H-direction upsample for channel c: (2H, H) @ (H, TC) on the MXU.
        u = jnp.dot(ah, z[c * h:(c + 1) * h, :], preferred_element_type=jnp.float32)
        acc = u + b_ref[c]
        # Residual 1x1 conv for channel c: scalar (SMEM) x slab accumulation on
        # the VPU.  At MCUNet's channel counts this is cheaper than an M=1 MXU
        # matmul and needs no in-kernel relayout.
        # TODO(synk): for large C2/COUT switch this to a flattened-layout MXU matmul.
        for k in range(c2):
            acc = acc + w2_ref[c, k] * res_ref[0, k].astype(jnp.float32)
        o_ref[0, c] = acc.astype(o_ref.dtype)


def mc_up(x, x_res, w, b):
    """Fused MCUp layer.

    x:     (N, C1, H, W)    low-res input
    x_res: (N, C2, 2H, 2W)  high-res residual
    w:     (COUT, C1+C2)    1x1 conv weight    b: (COUT,) bias
    returns (N, COUT, 2H, 2W) bfloat16
    """
    n, c1, h, wd = x.shape
    nr, c2, h2, w2d = x_res.shape
    assert nr == n and h2 == 2 * h and w2d == 2 * wd, (x.shape, x_res.shape)
    cout = w.shape[0]
    assert w.shape[1] == c1 + c2, (w.shape, c1, c2)

    w1 = w[:, :c1].astype(jnp.float32)
    wres = w[:, c1:].astype(jnp.float32)

    # Hoisted channel mix Y = W1 @ x (tiny f32 XLA matmul, once per layer).
    y = jnp.einsum("oc,nchw->nohw", w1, x.astype(jnp.float32))
    y2 = y.reshape(n, cout * h, wd)  # fold channels into the row (M) dim

    ah = jnp.asarray(_up2x_matrix(h), jnp.float32)        # (2H, H)
    awt = jnp.asarray(_up2x_matrix(wd).T, jnp.float32)    # (W, 2W)
    res = x_res.astype(jnp.bfloat16)
    b1 = b.astype(jnp.float32).reshape(cout)

    budget = _vmem_budget_bytes()
    tc = _pick_col_tile(n, w2d, cout, c2, h, wd, budget)
    n_col = w2d // tc

    kernel = functools.partial(_mcup_kernel, cout, c2, h)
    out = pl.pallas_call(
        kernel,
        out_shape=jax.ShapeDtypeStruct((n, cout, h2, w2d), jnp.bfloat16),
        grid=(n, n_col),
        in_specs=[
            pl.BlockSpec((1, cout * h, wd), lambda i, j: (i, 0, 0)),
            pl.BlockSpec((1, c2, h2, tc), lambda i, j: (i, 0, 0, j)),
            pl.BlockSpec((wd, tc), lambda i, j: (0, j)),
            pl.BlockSpec((h2, h), lambda i, j: (0, 0)),
            pl.BlockSpec(memory_space=pltpu.MemorySpace.SMEM),
            pl.BlockSpec(memory_space=pltpu.MemorySpace.SMEM),
        ],
        out_specs=pl.BlockSpec((1, cout, h2, tc), lambda i, j: (i, 0, 0, j)),
        compiler_params=pltpu.CompilerParams(
            dimension_semantics=("parallel", "parallel"),
            vmem_limit_bytes=int(budget)),
    )(y2, res, awt, ah, wres, b1)
    return out


# ----------------------------------------------------------------------------
# MCUpsample forward (pyramid of fused MCUp layers)
# ----------------------------------------------------------------------------
def init_mc_upsample_params(key, channels, n_layers):
    """Deterministic per-layer conv params; mirrors MCUpsample.__init__ channel math."""
    params = []
    for l in range(n_layers - 1):
        factor = 2 ** l
        cin = channels // factor
        cout = channels // (factor * 2)
        if l < n_layers - 2:
            cout = cout // 2
        k = jax.random.fold_in(key, l)
        w = jax.random.normal(k, (cout, cin), jnp.float32) / jnp.sqrt(float(cin))
        b = 0.01 * jnp.arange(cout, dtype=jnp.float32)
        params.append((w, b))
    return params


def mc_upsample_forward(params, x, xL):
    """x: (N, channels//2, 2*B0, 2*B0); xL: residual list (popped from the end)."""
    xL = list(xL)
    for l in range(len(params)):
        w, b = params[l]
        x = mc_up(x, xL.pop(), w, b)
    return x


# ----------------------------------------------------------------------------
# Pure-JAX f32 reference (same math, unfused) for correctness checking.
# ----------------------------------------------------------------------------
def _mc_up_ref(x, x_res, w, b):
    n, c, h, wd = x.shape
    ah = jnp.asarray(_up2x_matrix(h))
    awt = jnp.asarray(_up2x_matrix(wd).T)
    up = jnp.einsum("ph,nchw,wq->ncpq", ah, x.astype(jnp.float32), awt)
    cat = jnp.concatenate([up, x_res.astype(jnp.float32)], axis=1)
    return jnp.einsum("oc,nchw->nohw", w, cat) + b[None, :, None, None]


def mc_upsample_forward_ref(params, x, xL):
    xL = list(xL)
    for l in range(len(params)):
        w, b = params[l]
        x = _mc_up_ref(x, xL.pop(), w, b)
    return x


# ----------------------------------------------------------------------------
if __name__ == "__main__":
    batch = 2
    channels = 8
    B0 = 4
    n_layers = 3

    key = jax.random.PRNGKey(0)
    kx, kr0, kr1, kp = jax.random.split(key, 4)

    # Input at the lowest resolution of the pyramid.
    x = jax.random.normal(kx, (batch, channels // 2, 2 * B0, 2 * B0), jnp.float32)

    # Residual skip connections (ordered so xL.pop() yields the layer-0 residual first).
    res_l1 = jax.random.normal(kr1, (batch, channels // 4, 8 * B0, 8 * B0), jnp.float32)
    res_l0 = jax.random.normal(kr0, (batch, channels // 2, 4 * B0, 4 * B0), jnp.float32)
    xL = [res_l1, res_l0]

    params = init_mc_upsample_params(kp, channels, n_layers)

    fwd = jax.jit(functools.partial(mc_upsample_forward, params))
    out = jax.block_until_ready(fwd(x, xL))

    expected_shape = (batch, channels // (2 ** (n_layers - 1)),
                      2 * B0 * (2 ** (n_layers - 1)), 2 * B0 * (2 ** (n_layers - 1)))
    assert out.shape == expected_shape, (out.shape, expected_shape)
    assert bool(jnp.all(jnp.isfinite(out)))

    # Correctness vs. unfused f32 reference (tolerance tightened: only the
    # residual read and the output store are bf16 now).
    ref = mc_upsample_forward_ref(params, x, xL)
    err = float(jnp.max(jnp.abs(out.astype(jnp.float32) - ref)))
    scale = float(jnp.maximum(1.0, jnp.max(jnp.abs(ref))))
    assert err <= 0.02 * scale, (err, scale)

    print("KERNEL_OK")
</pallas_src>

<mosaic_0001>
module attributes {stable_mosaic.version = 11 : i64} {
  func.func @_mcup_kernel(%arg0: i32, %arg1: i32, %arg2: memref<1x16x8xf32, #tpu.memory_space<vmem>>, %arg3: memref<1x4x16x16xbf16, #tpu.memory_space<vmem>>, %arg4: memref<8x16xf32, #tpu.memory_space<vmem>>, %arg5: memref<16x8xf32, #tpu.memory_space<vmem>>, %arg6: memref<2x4xf32, #tpu.memory_space<smem>>, %arg7: memref<2xf32, #tpu.memory_space<smem>>, %arg8: memref<1x2x16x16xbf16, #tpu.memory_space<vmem>>) attributes {dimension_semantics = [#tpu.dimension_semantics<parallel>, #tpu.dimension_semantics<parallel>], iteration_bounds = array<i64: 2, 1>, scalar_prefetch = 0 : i64, scratch_operands = 0 : i64, tpu.core_type = #tpu.core_type<tc>, window_params = [{transform_indices = @transform_0, window_bounds = array<i64: 1, 16, 8>}, {transform_indices = @transform_1, window_bounds = array<i64: 1, 4, 16, 16>}, {transform_indices = @transform_2, window_bounds = array<i64: 8, 16>}, {pipeline_mode = #tpu.pipeline_mode<synchronous>, transform_indices = @transform_3, window_bounds = array<i64: 16, 8>}, {transform_indices = @transform_4, window_bounds = array<i64: 2, 4>}, {transform_indices = @transform_5, window_bounds = array<i64: 2>}, {transform_indices = @transform_6, window_bounds = array<i64: 1, 2, 16, 16>}]} {
    %c0 = arith.constant 0 : index
    %c0_0 = arith.constant 0 : index
    %c0_1 = arith.constant 0 : index
    %0 = vector.load %arg2[%c0, %c0_0, %c0_1] : memref<1x16x8xf32, #tpu.memory_space<vmem>>, vector<1x16x8xf32>
    %1 = vector.shape_cast %0 : vector<1x16x8xf32> to vector<16x8xf32>
    %c0_2 = arith.constant 0 : index
    %c0_3 = arith.constant 0 : index
    %2 = vector.load %arg4[%c0_2, %c0_3] : memref<8x16xf32, #tpu.memory_space<vmem>>, vector<8x16xf32>
    %cst = arith.constant dense<0.000000e+00> : vector<16x16xf32>
    %3 = tpu.matmul %1, %2, %cst {dimension_numbers = #tpu.dot_dimension_numbers<[1], [0], [0], [1], [0, 0, 1, 1], [], []>} : vector<16x8xf32>, vector<8x16xf32>, vector<16x16xf32> -> vector<16x16xf32>
    %c0_4 = arith.constant 0 : index
    %c0_5 = arith.constant 0 : index
    %4 = vector.load %arg5[%c0_4, %c0_5] : memref<16x8xf32, #tpu.memory_space<vmem>>, vector<16x8xf32>
    %5 = vector.extract_strided_slice %3 {offsets = [0, 0], sizes = [8, 16], strides = [1, 1]} : vector<16x16xf32> to vector<8x16xf32>
    %cst_6 = arith.constant dense<0.000000e+00> : vector<16x16xf32>
    %6 = tpu.matmul %4, %5, %cst_6 {dimension_numbers = #tpu.dot_dimension_numbers<[1], [0], [0], [1], [0, 0, 1, 1], [], []>} : vector<16x8xf32>, vector<8x16xf32>, vector<16x16xf32> -> vector<16x16xf32>
    %c0_7 = arith.constant 0 : index
    %7 = memref.load %arg7[%c0_7] : memref<2xf32, #tpu.memory_space<smem>>
    %8 = vector.broadcast %7 : f32 to vector<16x16xf32>
    %9 = arith.addf %6, %8 : vector<16x16xf32>
    %c0_8 = arith.constant 0 : index
    %c0_9 = arith.constant 0 : index
    %10 = memref.load %arg6[%c0_8, %c0_9] : memref<2x4xf32, #tpu.memory_space<smem>>
    %c0_10 = arith.constant 0 : index
    %c0_11 = arith.constant 0 : index
    %c0_12 = arith.constant 0 : index
    %c0_13 = arith.constant 0 : index
    %11 = vector.load %arg3[%c0_10, %c0_11, %c0_12, %c0_13] : memref<1x4x16x16xbf16, #tpu.memory_space<vmem>>, vector<1x1x16x16xbf16>
    %12 = vector.shape_cast %11 : vector<1x1x16x16xbf16> to vector<16x16xbf16>
    %13 = arith.extf %12 : vector<16x16xbf16> to vector<16x16xf32>
    %14 = vector.broadcast %10 : f32 to vector<16x16xf32>
    %15 = arith.mulf %14, %13 : vector<16x16xf32>
    %16 = arith.addf %9, %15 : vector<16x16xf32>
    %c0_14 = arith.constant 0 : index
    %c1 = arith.constant 1 : index
    %17 = memref.load %arg6[%c0_14, %c1] : memref<2x4xf32, #tpu.memory_space<smem>>
    %c0_15 = arith.constant 0 : index
    %c1_16 = arith.constant 1 : index
    %c0_17 = arith.constant 0 : index
    %c0_18 = arith.constant 0 : index
    %18 = vector.load %arg3[%c0_15, %c1_16, %c0_17, %c0_18] : memref<1x4x16x16xbf16, #tpu.memory_space<vmem>>, vector<1x1x16x16xbf16>
    %19 = vector.shape_cast %18 : vector<1x1x16x16xbf16> to vector<16x16xbf16>
    %20 = arith.extf %19 : vector<16x16xbf16> to vector<16x16xf32>
    %21 = vector.broadcast %17 : f32 to vector<16x16xf32>
    %22 = arith.mulf %21, %20 : vector<16x16xf32>
    %23 = arith.addf %16, %22 : vector<16x16xf32>
    %c0_19 = arith.constant 0 : index
    %c2 = arith.constant 2 : index
    %24 = memref.load %arg6[%c0_19, %c2] : memref<2x4xf32, #tpu.memory_space<smem>>
    %c0_20 = arith.constant 0 : index
    %c2_21 = arith.constant 2 : index
    %c0_22 = arith.constant 0 : index
    %c0_23 = arith.constant 0 : index
    %25 = vector.load %arg3[%c0_20, %c2_21, %c0_22, %c0_23] : memref<1x4x16x16xbf16, #tpu.memory_space<vmem>>, vector<1x1x16x16xbf16>
    %26 = vector.shape_cast %25 : vector<1x1x16x16xbf16> to vector<16x16xbf16>
    %27 = arith.extf %26 : vector<16x16xbf16> to vector<16x16xf32>
    %28 = vector.broadcast %24 : f32 to vector<16x16xf32>
    %29 = arith.mulf %28, %27 : vector<16x16xf32>
    %30 = arith.addf %23, %29 : vector<16x16xf32>
    %c0_24 = arith.constant 0 : index
    %c3 = arith.constant 3 : index
    %31 = memref.load %arg6[%c0_24, %c3] : memref<2x4xf32, #tpu.memory_space<smem>>
    %c0_25 = arith.constant 0 : index
    %c3_26 = arith.constant 3 : index
    %c0_27 = arith.constant 0 : index
    %c0_28 = arith.constant 0 : index
    %32 = vector.load %arg3[%c0_25, %c3_26, %c0_27, %c0_28] : memref<1x4x16x16xbf16, #tpu.memory_space<vmem>>, vector<1x1x16x16xbf16>
    %33 = vector.shape_cast %32 : vector<1x1x16x16xbf16> to vector<16x16xbf16>
    %34 = arith.extf %33 : vector<16x16xbf16> to vector<16x16xf32>
    %35 = vector.broadcast %31 : f32 to vector<16x16xf32>
    %36 = arith.mulf %35, %34 : vector<16x16xf32>
    %37 = arith.addf %30, %36 : vector<16x16xf32>
    %38 = arith.truncf %37 : vector<16x16xf32> to vector<16x16xbf16>
    %c0_29 = arith.constant 0 : index
    %c0_30 = arith.constant 0 : index
    %c0_31 = arith.constant 0 : index
    %c0_32 = arith.constant 0 : index
    %39 = vector.load %arg8[%c0_29, %c0_30, %c0_31, %c0_32] : memref<1x2x16x16xbf16, #tpu.memory_space<vmem>>, vector<1x1x16x16xbf16>
    %40 = vector.shape_cast %39 : vector<1x1x16x16xbf16> to vector<16x16xbf16>
    %41 = vector.shape_cast %38 : vector<16x16xbf16> to vector<1x1x16x16xbf16>
    tpu.vector_store %arg8[%c0_29, %c0_30, %c0_31, %c0_32], %41 {strides = array<i32>} : memref<1x2x16x16xbf16, #tpu.memory_space<vmem>>, vector<1x1x16x16xbf16>,
    %42 = vector.extract_strided_slice %3 {offsets = [8, 0], sizes = [8, 16], strides = [1, 1]} : vector<16x16xf32> to vector<8x16xf32>
    %cst_33 = arith.constant dense<0.000000e+00> : vector<16x16xf32>
    %43 = tpu.matmul %4, %42, %cst_33 {dimension_numbers = #tpu.dot_dimension_numbers<[1], [0], [0], [1], [0, 0, 1, 1], [], []>} : vector<16x8xf32>, vector<8x16xf32>, vector<16x16xf32> -> vector<16x16xf32>
    %c1_34 = arith.constant 1 : index
    %44 = memref.load %arg7[%c1_34] : memref<2xf32, #tpu.memory_space<smem>>
    %45 = vector.broadcast %44 : f32 to vector<16x16xf32>
    %46 = arith.addf %43, %45 : vector<16x16xf32>
    %c1_35 = arith.constant 1 : index
    %c0_36 = arith.constant 0 : index
    %47 = memref.load %arg6[%c1_35, %c0_36] : memref<2x4xf32, #tpu.memory_space<smem>>
    %c0_37 = arith.constant 0 : index
    %c0_38 = arith.constant 0 : index
    %c0_39 = arith.constant 0 : index
    %c0_40 = arith.constant 0 : index
    %48 = vector.load %arg3[%c0_37, %c0_38, %c0_39, %c0_40] : memref<1x4x16x16xbf16, #tpu.memory_space<vmem>>, vector<1x1x16x16xbf16>
    %49 = vector.shape_cast %48 : vector<1x1x16x16xbf16> to vector<16x16xbf16>
    %50 = arith.extf %49 : vector<16x16xbf16> to vector<16x16xf32>
    %51 = vector.broadcast %47 : f32 to vector<16x16xf32>
    %52 = arith.mulf %51, %50 : vector<16x16xf32>
    %53 = arith.addf %46, %52 : vector<16x16xf32>
    %c1_41 = arith.constant 1 : index
    %c1_42 = arith.constant 1 : index
    %54 = memref.load %arg6[%c1_41, %c1_42] : memref<2x4xf32, #tpu.memory_space<smem>>
    %c0_43 = arith.constant 0 : index
    %c1_44 = arith.constant 1 : index
    %c0_45 = arith.constant 0 : index
    %c0_46 = arith.constant 0 : index
    %55 = vector.load %arg3[%c0_43, %c1_44, %c0_45, %c0_46] : memref<1x4x16x16xbf16, #tpu.memory_space<vmem>>, vector<1x1x16x16xbf16>
    %56 = vector.shape_cast %55 : vector<1x1x16x16xbf16> to vector<16x16xbf16>
    %57 = arith.extf %56 : vector<16x16xbf16> to vector<16x16xf32>
    %58 = vector.broadcast %54 : f32 to vector<16x16xf32>
    %59 = arith.mulf %58, %57 : vector<16x16xf32>
    %60 = arith.addf %53, %59 : vector<16x16xf32>
    %c1_47 = arith.constant 1 : index
    %c2_48 = arith.constant 2 : index
    %61 = memref.load %arg6[%c1_47, %c2_48] : memref<2x4xf32, #tpu.memory_space<smem>>
    %c0_49 = arith.constant 0 : index
    %c2_50 = arith.constant 2 : index
    %c0_51 = arith.constant 0 : index
    %c0_52 = arith.constant 0 : index
    %62 = vector.load %arg3[%c0_49, %c2_50, %c0_51, %c0_52] : memref<1x4x16x16xbf16, #tpu.memory_space<vmem>>, vector<1x1x16x16xbf16>
    %63 = vector.shape_cast %62 : vector<1x1x16x16xbf16> to vector<16x16xbf16>
    %64 = arith.extf %63 : vector<16x16xbf16> to vector<16x16xf32>
    %65 = vector.broadcast %61 : f32 to vector<16x16xf32>
    %66 = arith.mulf %65, %64 : vector<16x16xf32>
    %67 = arith.addf %60, %66 : vector<16x16xf32>
    %c1_53 = arith.constant 1 : index
    %c3_54 = arith.constant 3 : index
    %68 = memref.load %arg6[%c1_53, %c3_54] : memref<2x4xf32, #tpu.memory_space<smem>>
    %c0_55 = arith.constant 0 : index
    %c3_56 = arith.constant 3 : index
    %c0_57 = arith.constant 0 : index
    %c0_58 = arith.constant 0 : index
    %69 = vector.load %arg3[%c0_55, %c3_56, %c0_57, %c0_58] : memref<1x4x16x16xbf16, #tpu.memory_space<vmem>>, vector<1x1x16x16xbf16>
    %70 = vector.shape_cast %69 : vector<1x1x16x16xbf16> to vector<16x16xbf16>
    %71 = arith.extf %70 : vector<16x16xbf16> to vector<16x16xf32>
    %72 = vector.broadcast %68 : f32 to vector<16x16xf32>
    %73 = arith.mulf %72, %71 : vector<16x16xf32>
    %74 = arith.addf %67, %73 : vector<16x16xf32>
    %75 = arith.truncf %74 : vector<16x16xf32> to vector<16x16xbf16>
    %c0_59 = arith.constant 0 : index
    %c1_60 = arith.constant 1 : index
    %c0_61 = arith.constant 0 : index
    %c0_62 = arith.constant 0 : index
    %76 = vector.load %arg8[%c0_59, %c1_60, %c0_61, %c0_62] : memref<1x2x16x16xbf16, #tpu.memory_space<vmem>>, vector<1x1x16x16xbf16>
    %77 = vector.shape_cast %76 : vector<1x1x16x16xbf16> to vector<16x16xbf16>
    %78 = vector.shape_cast %75 : vector<16x16xbf16> to vector<1x1x16x16xbf16>
    tpu.vector_store %arg8[%c0_59, %c1_60, %c0_61, %c0_62], %78 {strides = array<i32>} : memref<1x2x16x16xbf16, #tpu.memory_space<vmem>>, vector<1x1x16x16xbf16>,
    return
  }
  func.func @transform_0(%arg0: i32, %arg1: i32) -> (i32, i32, i32) {
    %c0_i32 = arith.constant 0 : i32
    %c0_i32_0 = arith.constant 0 : i32
    %c0_i32_1 = arith.constant 0 : i32
    return %arg0, %c0_i32, %c0_i32_0 : i32, i32, i32
  }
  func.func @transform_1(%arg0: i32, %arg1: i32) -> (i32, i32, i32, i32) {
    %c0_i32 = arith.constant 0 : i32
    %c0_i32_0 = arith.constant 0 : i32
    %c0_i32_1 = arith.constant 0 : i32
    return %arg0, %c0_i32, %c0_i32_0, %arg1 : i32, i32, i32, i32
  }
  func.func @transform_2(%arg0: i32, %arg1: i32) -> (i32, i32) {
    %c0_i32 = arith.constant 0 : i32
    %c0_i32_0 = arith.constant 0 : i32
    return %c0_i32, %arg1 : i32, i32
  }
  func.func @transform_3(%arg0: i32, %arg1: i32) -> (i32, i32) {
    %c0_i32 = arith.constant 0 : i32
    %c0_i32_0 = arith.constant 0 : i32
    %c0_i32_1 = arith.constant 0 : i32
    return %c0_i32, %c0_i32_0 : i32, i32
  }
  func.func @transform_4(%arg0: i32, %arg1: i32) -> (i32, i32) {
    %c0_i32 = arith.constant 0 : i32
    %c0_i32_0 = arith.constant 0 : i32
    %c0_i32_1 = arith.constant 0 : i32
    return %c0_i32, %c0_i32_0 : i32, i32
  }
  func.func @transform_5(%arg0: i32, %arg1: i32) -> i32 {
    %c0_i32 = arith.constant 0 : i32
    %c0_i32_0 = arith.constant 0 : i32
    return %c0_i32 : i32
  }
  func.func @transform_6(%arg0: i32, %arg1: i32) -> (i32, i32, i32, i32) {
    %c0_i32 = arith.constant 0 : i32
    %c0_i32_0 = arith.constant 0 : i32
    %c0_i32_1 = arith.constant 0 : i32
    return %arg0, %c0_i32, %c0_i32_0, %arg1 : i32, i32, i32, i32
  }
}

module attributes {stable_mosaic.version = 11 : i64} {
  func.func @_mcup_kernel(%arg0: i32, %arg1: i32, %arg2: memref<1x32x16xf32, #tpu.memory_space<vmem>>, %arg3: memref<1x2x32x32xbf16, #tpu.memory_space<vmem>>, %arg4: memref<16x32xf32, #tpu.memory_space<vmem>>, %arg5: memref<32x16xf32, #tpu.memory_space<vmem>>, %arg6: memref<2x2xf32, #tpu.memory_space<smem>>, %arg7: memref<2xf32, #tpu.memory_space<smem>>, %arg8: memref<1x2x32x32xbf16, #tpu.memory_space<vmem>>) attributes {dimension_semantics = [#tpu.dimension_semantics<parallel>, #tpu.dimension_semantics<parallel>], iteration_bounds = array<i64: 2, 1>, scalar_prefetch = 0 : i64, scratch_operands = 0 : i64, tpu.core_type = #tpu.core_type<tc>, window_params = [{transform_indices = @transform_0, window_bounds = array<i64: 1, 32, 16>}, {transform_indices = @transform_1, window_bounds = array<i64: 1, 2, 32, 32>}, {transform_indices = @transform_2, window_bounds = array<i64: 16, 32>}, {pipeline_mode = #tpu.pipeline_mode<synchronous>, transform_indices = @transform_3, window_bounds = array<i64: 32, 16>}, {transform_indices = @transform_4, window_bounds = array<i64: 2, 2>}, {transform_indices = @transform_5, window_bounds = array<i64: 2>}, {transform_indices = @transform_6, window_bounds = array<i64: 1, 2, 32, 32>}]} {
    %c0 = arith.constant 0 : index
    %c0_0 = arith.constant 0 : index
    %c0_1 = arith.constant 0 : index
    %0 = vector.load %arg2[%c0, %c0_0, %c0_1] : memref<1x32x16xf32, #tpu.memory_space<vmem>>, vector<1x32x16xf32>
    %1 = vector.shape_cast %0 : vector<1x32x16xf32> to vector<32x16xf32>
    %c0_2 = arith.constant 0 : index
    %c0_3 = arith.constant 0 : index
    %2 = vector.load %arg4[%c0_2, %c0_3] : memref<16x32xf32, #tpu.memory_space<vmem>>, vector<16x32xf32>
    %cst = arith.constant dense<0.000000e+00> : vector<32x32xf32>
    %3 = tpu.matmul %1, %2, %cst {dimension_numbers = #tpu.dot_dimension_numbers<[1], [0], [0], [1], [0, 0, 1, 1], [], []>} : vector<32x16xf32>, vector<16x32xf32>, vector<32x32xf32> -> vector<32x32xf32>
    %c0_4 = arith.constant 0 : index
    %c0_5 = arith.constant 0 : index
    %4 = vector.load %arg5[%c0_4, %c0_5] : memref<32x16xf32, #tpu.memory_space<vmem>>, vector<32x16xf32>
    %5 = vector.extract_strided_slice %3 {offsets = [0, 0], sizes = [16, 32], strides = [1, 1]} : vector<32x32xf32> to vector<16x32xf32>
    %cst_6 = arith.constant dense<0.000000e+00> : vector<32x32xf32>
    %6 = tpu.matmul %4, %5, %cst_6 {dimension_numbers = #tpu.dot_dimension_numbers<[1], [0], [0], [1], [0, 0, 1, 1], [], []>} : vector<32x16xf32>, vector<16x32xf32>, vector<32x32xf32> -> vector<32x32xf32>
    %c0_7 = arith.constant 0 : index
    %7 = memref.load %arg7[%c0_7] : memref<2xf32, #tpu.memory_space<smem>>
    %8 = vector.broadcast %7 : f32 to vector<32x32xf32>
    %9 = arith.addf %6, %8 : vector<32x32xf32>
    %c0_8 = arith.constant 0 : index
    %c0_9 = arith.constant 0 : index
    %10 = memref.load %arg6[%c0_8, %c0_9] : memref<2x2xf32, #tpu.memory_space<smem>>
    %c0_10 = arith.constant 0 : index
    %c0_11 = arith.constant 0 : index
    %c0_12 = arith.constant 0 : index
    %c0_13 = arith.constant 0 : index
    %11 = vector.load %arg3[%c0_10, %c0_11, %c0_12, %c0_13] : memref<1x2x32x32xbf16, #tpu.memory_space<vmem>>, vector<1x1x32x32xbf16>
    %12 = vector.shape_cast %11 : vector<1x1x32x32xbf16> to vector<32x32xbf16>
    %13 = arith.extf %12 : vector<32x32xbf16> to vector<32x32xf32>
    %14 = vector.broadcast %10 : f32 to vector<32x32xf32>
    %15 = arith.mulf %14, %13 : vector<32x32xf32>
    %16 = arith.addf %9, %15 : vector<32x32xf32>
    %c0_14 = arith.constant 0 : index
    %c1 = arith.constant 1 : index
    %17 = memref.load %arg6[%c0_14, %c1] : memref<2x2xf32, #tpu.memory_space<smem>>
    %c0_15 = arith.constant 0 : index
    %c1_16 = arith.constant 1 : index
    %c0_17 = arith.constant 0 : index
    %c0_18 = arith.constant 0 : index
    %18 = vector.load %arg3[%c0_15, %c1_16, %c0_17, %c0_18] : memref<1x2x32x32xbf16, #tpu.memory_space<vmem>>, vector<1x1x32x32xbf16>
    %19 = vector.shape_cast %18 : vector<1x1x32x32xbf16> to vector<32x32xbf16>
    %20 = arith.extf %19 : vector<32x32xbf16> to vector<32x32xf32>
    %21 = vector.broadcast %17 : f32 to vector<32x32xf32>
    %22 = arith.mulf %21, %20 : vector<32x32xf32>
    %23 = arith.addf %16, %22 : vector<32x32xf32>
    %24 = arith.truncf %23 : vector<32x32xf32> to vector<32x32xbf16>
    %c0_19 = arith.constant 0 : index
    %c0_20 = arith.constant 0 : index
    %c0_21 = arith.constant 0 : index
    %c0_22 = arith.constant 0 : index
    %25 = vector.load %arg8[%c0_19, %c0_20, %c0_21, %c0_22] : memref<1x2x32x32xbf16, #tpu.memory_space<vmem>>, vector<1x1x32x32xbf16>
    %26 = vector.shape_cast %25 : vector<1x1x32x32xbf16> to vector<32x32xbf16>
    %27 = vector.shape_cast %24 : vector<32x32xbf16> to vector<1x1x32x32xbf16>
    tpu.vector_store %arg8[%c0_19, %c0_20, %c0_21, %c0_22], %27 {strides = array<i32>} : memref<1x2x32x32xbf16, #tpu.memory_space<vmem>>, vector<1x1x32x32xbf16>,
    %28 = vector.extract_strided_slice %3 {offsets = [16, 0], sizes = [16, 32], strides = [1, 1]} : vector<32x32xf32> to vector<16x32xf32>
    %cst_23 = arith.constant dense<0.000000e+00> : vector<32x32xf32>
    %29 = tpu.matmul %4, %28, %cst_23 {dimension_numbers = #tpu.dot_dimension_numbers<[1], [0], [0], [1], [0, 0, 1, 1], [], []>} : vector<32x16xf32>, vector<16x32xf32>, vector<32x32xf32> -> vector<32x32xf32>
    %c1_24 = arith.constant 1 : index
    %30 = memref.load %arg7[%c1_24] : memref<2xf32, #tpu.memory_space<smem>>
    %31 = vector.broadcast %30 : f32 to vector<32x32xf32>
    %32 = arith.addf %29, %31 : vector<32x32xf32>
    %c1_25 = arith.constant 1 : index
    %c0_26 = arith.constant 0 : index
    %33 = memref.load %arg6[%c1_25, %c0_26] : memref<2x2xf32, #tpu.memory_space<smem>>
    %c0_27 = arith.constant 0 : index
    %c0_28 = arith.constant 0 : index
    %c0_29 = arith.constant 0 : index
    %c0_30 = arith.constant 0 : index
    %34 = vector.load %arg3[%c0_27, %c0_28, %c0_29, %c0_30] : memref<1x2x32x32xbf16, #tpu.memory_space<vmem>>, vector<1x1x32x32xbf16>
    %35 = vector.shape_cast %34 : vector<1x1x32x32xbf16> to vector<32x32xbf16>
    %36 = arith.extf %35 : vector<32x32xbf16> to vector<32x32xf32>
    %37 = vector.broadcast %33 : f32 to vector<32x32xf32>
    %38 = arith.mulf %37, %36 : vector<32x32xf32>
    %39 = arith.addf %32, %38 : vector<32x32xf32>
    %c1_31 = arith.constant 1 : index
    %c1_32 = arith.constant 1 : index
    %40 = memref.load %arg6[%c1_31, %c1_32] : memref<2x2xf32, #tpu.memory_space<smem>>
    %c0_33 = arith.constant 0 : index
    %c1_34 = arith.constant 1 : index
    %c0_35 = arith.constant 0 : index
    %c0_36 = arith.constant 0 : index
    %41 = vector.load %arg3[%c0_33, %c1_34, %c0_35, %c0_36] : memref<1x2x32x32xbf16, #tpu.memory_space<vmem>>, vector<1x1x32x32xbf16>
    %42 = vector.shape_cast %41 : vector<1x1x32x32xbf16> to vector<32x32xbf16>
    %43 = arith.extf %42 : vector<32x32xbf16> to vector<32x32xf32>
    %44 = vector.broadcast %40 : f32 to vector<32x32xf32>
    %45 = arith.mulf %44, %43 : vector<32x32xf32>
    %46 = arith.addf %39, %45 : vector<32x32xf32>
    %47 = arith.truncf %46 : vector<32x32xf32> to vector<32x32xbf16>
    %c0_37 = arith.constant 0 : index
    %c1_38 = arith.constant 1 : index
    %c0_39 = arith.constant 0 : index
    %c0_40 = arith.constant 0 : index
    %48 = vector.load %arg8[%c0_37, %c1_38, %c0_39, %c0_40] : memref<1x2x32x32xbf16, #tpu.memory_space<vmem>>, vector<1x1x32x32xbf16>
    %49 = vector.shape_cast %48 : vector<1x1x32x32xbf16> to vector<32x32xbf16>
    %50 = vector.shape_cast %47 : vector<32x32xbf16> to vector<1x1x32x32xbf16>
    tpu.vector_store %arg8[%c0_37, %c1_38, %c0_39, %c0_40], %50 {strides = array<i32>} : memref<1x2x32x32xbf16, #tpu.memory_space<vmem>>, vector<1x1x32x32xbf16>,
    return
  }
  func.func @transform_0(%arg0: i32, %arg1: i32) -> (i32, i32, i32) {
    %c0_i32 = arith.constant 0 : i32
    %c0_i32_0 = arith.constant 0 : i32
    %c0_i32_1 = arith.constant 0 : i32
    return %arg0, %c0_i32, %c0_i32_0 : i32, i32, i32
  }
  func.func @transform_1(%arg0: i32, %arg1: i32) -> (i32, i32, i32, i32) {
    %c0_i32 = arith.constant 0 : i32
    %c0_i32_0 = arith.constant 0 : i32
    %c0_i32_1 = arith.constant 0 : i32
    return %arg0, %c0_i32, %c0_i32_0, %arg1 : i32, i32, i32, i32
  }
  func.func @transform_2(%arg0: i32, %arg1: i32) -> (i32, i32) {
    %c0_i32 = arith.constant 0 : i32
    %c0_i32_0 = arith.constant 0 : i32
    return %c0_i32, %arg1 : i32, i32
  }
  func.func @transform_3(%arg0: i32, %arg1: i32) -> (i32, i32) {
    %c0_i32 = arith.constant 0 : i32
    %c0_i32_0 = arith.constant 0 : i32
    %c0_i32_1 = arith.constant 0 : i32
    return %c0_i32, %c0_i32_0 : i32, i32
  }
  func.func @transform_4(%arg0: i32, %arg1: i32) -> (i32, i32) {
    %c0_i32 = arith.constant 0 : i32
    %c0_i32_0 = arith.constant 0 : i32
    %c0_i32_1 = arith.constant 0 : i32
    return %c0_i32, %c0_i32_0 : i32, i32
  }
  func.func @transform_5(%arg0: i32, %arg1: i32) -> i32 {
    %c0_i32 = arith.constant 0 : i32
    %c0_i32_0 = arith.constant 0 : i32
    return %c0_i32 : i32
  }
  func.func @transform_6(%arg0: i32, %arg1: i32) -> (i32, i32, i32, i32) {
    %c0_i32 = arith.constant 0 : i32
    %c0_i32_0 = arith.constant 0 : i32
    %c0_i32_1 = arith.constant 0 : i32
    return %arg0, %c0_i32, %c0_i32_0, %arg1 : i32, i32, i32, i32
  }
}

</mosaic_0001>

<llo_original>
// kernel: mc_upsample_forward.2
$region0: #{mc_upsample_forward.2}
  #allocation0 [shape = 'u32[]', space=smem, size = 0x4, offset = 0x4, fixed_abs, tag = 'smem constant byte address 0x4 - core index']
  #allocation1 [shape = 'u32[144,128]{1,0:T(1,128)}', space=vmem, size = 0x12000, scoped, tag = 'internal scratch']
  %s0 = inlined_call_operand.vmem [shape: f32[2,16,8], index: 0, kind: input, shape index: {}]
  %s1 = inlined_call_operand.vmem [shape: bf16[2,4,16,16], index: 1, kind: input, shape index: {}]
  %s2 = inlined_call_operand.vmem [shape: f32[8,16], index: 2, kind: input, shape index: {}]
  %s3 = inlined_call_operand.vmem [shape: f32[16,8], index: 3, kind: input, shape index: {}]
  %s4 = inlined_call_operand.vmem [shape: f32[2,4], index: 4, kind: input, shape index: {}]
  %s5 = inlined_call_operand.vmem [shape: f32[2], index: 5, kind: input, shape index: {}]
  %s6 = inlined_call_operand.vmem [shape: bf16[2,2,16,16], index: 6, kind: output, shape index: {}]
  %s7 = sld [smem:[#allocation0]]
  $region65: #{mc_upsample_forward.2} parent=0
    _
  %s9 = ssub.s32 1, %s7
  %s10 = scalar_select 0, %s9, %s7
  $region1: #{mc_upsample_forward.2} parent=0
    #allocation2 [shape = 'u8[1024]{0}', space=smem, size = 0x400, scoped, tag = 'input window, operand 4, single buffered']
    #allocation3 [shape = 's32[2]{0}', space=sflag, size = 0x8, scoped, tag = 'scoped memory for mc_upsample_forward.2']
    #allocation4 [shape = 'u8[512]{0}', space=smem, size = 0x200, scoped, tag = 'input window, operand 5, single buffered']
    #allocation5 [shape = 's32[1]{0}', space=sflag, size = 0x4, scoped, tag = 'scoped memory for mc_upsample_forward.2']
    %11 = vsyncpa [#allocation3], 0
    %12 = vsyncpa [#allocation5], 0
    loop: start=0, step=1, limit=4
    $region2: #{mc_upsample_forward.2} parent=1 // loop_pre_header
      _
    $region3: #{mc_upsample_forward.2} parent=1 // loop_header
      %s14 = sphi 0, %s18
      %p15 = scmp.ge.s32.totalorder %s14, 4
      %s21 = sphi 0, %s33
      %s22 = sphi 0, %s29
      %s23 = sphi 0, %s21
      %s24 = sphi 0, %s22
      %s25 = sphi 0, %s23
      %s26 = sphi 0, %s24
      %s36 = sphi 0, %s38
      %s39 = sphi 0, %s36
      %s40 = sphi 0, %s39
      %s56 = sphi 0, %s40
      %s64 = sphi 0, %s66
      %s67 = sphi 0, %s64
      %s68 = sphi 0, %s67
      %s84 = sphi 0, %s68
      %s90 = sphi 0, %s92
      %s93 = sphi 0, %s90
      %s94 = sphi 0, %s93
      %s110 = sphi 0, %s94
      %s114 = sphi 0, %s114
      %s116 = sphi 0, %s114
      %s117 = sphi 0, %s116
      %s131 = sphi 0, %s117
      %s135 = sphi 0, %s135
      %s137 = sphi 0, %s135
      %s138 = sphi 0, %s137
      %s152 = sphi 0, %s138
      %s156 = sphi 0, %s156
      %s158 = sphi 0, %s156
      %s159 = sphi 0, %s158
      %s173 = sphi 0, %s159
      %s181 = sphi 0, %s183
      %s184 = sphi 0, %s181
      %s185 = sphi 0, %s184
      %s201 = sphi 0, %s185
    $region4: #{mc_upsample_forward.2} parent=1 // loop_header_branch
      %17 = sbr.rel (%p15) target = $region8
    $region5: #{mc_upsample_forward.2} parent=1 // loop_body
      %s19 = ssub.s32 %s14, 1
      %s20 = ssub.s32 %s14, 2
      %s27 = sadd.s32 1, %s22
      %p28 = scmp.ge.s32.totalorder %s27, 1
      %s29 = scalar_select %p28, 0, %s27
      %s30 = sadd.s32 1, %s21
      %s31 = scalar_select %p28, %s30, %s21
      %p32 = scmp.ge.s32.totalorder %s31, 2
      %s33 = scalar_select %p32, 0, %s31
      %s34 = ssub.s32 %s21, %s33
      %p35 = scmp.eq.s32.totalorder %s34, 0
      %s37 = sadd.s32 %s36, 1
      %s38 = scalar_select %p35, %s36, %s37
      %p41 = pneg %p35
      %p42 = scmp.eq.s32.totalorder %s14, 1
      %p43 = por %p41, %p42
      %p44 = scmp.ne.s32.totalorder %s36, %s39
      %p45 = scmp.eq.s32.totalorder %s14, 0
      %p46 = por %p44, %p45
      %p47 = scmp.ne.s32.totalorder %s36, %s39
      %p48 = scmp.eq.s32.totalorder %s19, 1
      %p49 = por %p47, %p48
      %p50 = scmp.ne.s32.totalorder %s39, %s40
      %p51 = scmp.eq.s32.totalorder %s19, 0
      %p52 = por %p50, %p51
      %p53 = scmp.ne.s32.totalorder %s39, %s40
      %p54 = scmp.eq.s32.totalorder %s20, 1
      %p55 = por %p53, %p54
      %p57 = scmp.ne.s32.totalorder %s40, %s56
      %p58 = scmp.eq.s32.totalorder %s20, 0
      %p59 = por %p57, %p58
      %s60 = ssub.s32 %s21, %s33
      %s61 = ssub.s32 %s22, %s29
      %s62 = sor.u32 %s60, %s61
      %p63 = scmp.eq.s32.totalorder %s62, 0
      %s65 = sadd.s32 %s64, 1
      %s66 = scalar_select %p63, %s64, %s65
      %p69 = pneg %p63
      %p70 = scmp.eq.s32.totalorder %s14, 1
      %p71 = por %p69, %p70
      %p72 = scmp.ne.s32.totalorder %s64, %s67
      %p73 = scmp.eq.s32.totalorder %s14, 0
      %p74 = por %p72, %p73
      %p75 = scmp.ne.s32.totalorder %s64, %s67
      %p76 = scmp.eq.s32.totalorder %s19, 1
      %p77 = por %p75, %p76
      %p78 = scmp.ne.s32.totalorder %s67, %s68
      %p79 = scmp.eq.s32.totalorder %s19, 0
      %p80 = por %p78, %p79
      %p81 = scmp.ne.s32.totalorder %s67, %s68
      %p82 = scmp.eq.s32.totalorder %s20, 1
      %p83 = por %p81, %p82
      %p85 = scmp.ne.s32.totalorder %s68, %s84
      %p86 = scmp.eq.s32.totalorder %s20, 0
      %p87 = por %p85, %p86
      %s88 = ssub.s32 %s22, %s29
      %p89 = scmp.eq.s32.totalorder %s88, 0
      %s91 = sadd.s32 %s90, 1
      %s92 = scalar_select %p89, %s90, %s91
      %p95 = pneg %p89
      %p96 = scmp.eq.s32.totalorder %s14, 1
      %p97 = por %p95, %p96
      %p98 = scmp.ne.s32.totalorder %s90, %s93
      %p99 = scmp.eq.s32.totalorder %s14, 0
      %p100 = por %p98, %p99
      %p101 = scmp.ne.s32.totalorder %s90, %s93
      %p102 = scmp.eq.s32.totalorder %s19, 1
      %p103 = por %p101, %p102
      %p104 = scmp.ne.s32.totalorder %s93, %s94
      %p105 = scmp.eq.s32.totalorder %s19, 0
      %p106 = por %p104, %p105
      %p107 = scmp.ne.s32.totalorder %s93, %s94
      %p108 = scmp.eq.s32.totalorder %s20, 1
      %p109 = por %p107, %p108
      %p111 = scmp.ne.s32.totalorder %s94, %s110
      %p112 = scmp.eq.s32.totalorder %s20, 0
      %p113 = por %p111, %p112
      %s115 = sadd.s32 %s114, 1
      %p118 = scmp.eq.s32.totalorder %s14, 1
      %p119 = scmp.ne.s32.totalorder %s114, %s116
      %p120 = scmp.eq.s32.totalorder %s14, 0
      %p121 = por %p119, %p120
      %p122 = scmp.ne.s32.totalorder %s114, %s116
      %p123 = scmp.eq.s32.totalorder %s19, 1
      %p124 = por %p122, %p123
      %p125 = scmp.ne.s32.totalorder %s116, %s117
      %p126 = scmp.eq.s32.totalorder %s19, 0
      %p127 = por %p125, %p126
      %p128 = scmp.ne.s32.totalorder %s116, %s117
      %p129 = scmp.eq.s32.totalorder %s20, 1
      %p130 = por %p128, %p129
      %p132 = scmp.ne.s32.totalorder %s117, %s131
      %p133 = scmp.eq.s32.totalorder %s20, 0
      %p134 = por %p132, %p133
      %s136 = sadd.s32 %s135, 1
      %p139 = scmp.eq.s32.totalorder %s14, 1
      %p140 = scmp.ne.s32.totalorder %s135, %s137
      %p141 = scmp.eq.s32.totalorder %s14, 0
      %p142 = por %p140, %p141
      %p143 = scmp.ne.s32.totalorder %s135, %s137
      %p144 = scmp.eq.s32.totalorder %s19, 1
      %p145 = por %p143, %p144
      %p146 = scmp.ne.s32.totalorder %s137, %s138
      %p147 = scmp.eq.s32.totalorder %s19, 0
      %p148 = por %p146, %p147
      %p149 = scmp.ne.s32.totalorder %s137, %s138
      %p150 = scmp.eq.s32.totalorder %s20, 1
      %p151 = por %p149, %p150
      %p153 = scmp.ne.s32.totalorder %s138, %s152
      %p154 = scmp.eq.s32.totalorder %s20, 0
      %p155 = por %p153, %p154
      %s157 = sadd.s32 %s156, 1
      %p160 = scmp.eq.s32.totalorder %s14, 1
      %p161 = scmp.ne.s32.totalorder %s156, %s158
      %p162 = scmp.eq.s32.totalorder %s14, 0
      %p163 = por %p161, %p162
      %p164 = scmp.ne.s32.totalorder %s156, %s158
      %p165 = scmp.eq.s32.totalorder %s19, 1
      %p166 = por %p164, %p165
      %p167 = scmp.ne.s32.totalorder %s158, %s159
      %p168 = scmp.eq.s32.totalorder %s19, 0
      %p169 = por %p167, %p168
      %p170 = scmp.ne.s32.totalorder %s158, %s159
      %p171 = scmp.eq.s32.totalorder %s20, 1
      %p172 = por %p170, %p171
      %p174 = scmp.ne.s32.totalorder %s159, %s173
      %p175 = scmp.eq.s32.totalorder %s20, 0
      %p176 = por %p174, %p175
      %s177 = ssub.s32 %s21, %s33
      %s178 = ssub.s32 %s22, %s29
      %s179 = sor.u32 %s177, %s178
      %p180 = scmp.eq.s32.totalorder %s179, 0
      %s182 = sadd.s32 %s181, 1
      %s183 = scalar_select %p180, %s181, %s182
      %p186 = pneg %p180
      %p187 = scmp.eq.s32.totalorder %s14, 1
      %p188 = por %p186, %p187
      %p189 = scmp.ne.s32.totalorder %s181, %s184
      %p190 = scmp.eq.s32.totalorder %s14, 0
      %p191 = por %p189, %p190
      %p192 = scmp.ne.s32.totalorder %s181, %s184
      %p193 = scmp.eq.s32.totalorder %s19, 1
      %p194 = por %p192, %p193
      %p195 = scmp.ne.s32.totalorder %s184, %s185
      %p196 = scmp.eq.s32.totalorder %s19, 0
      %p197 = por %p195, %p196
      %p198 = scmp.ne.s32.totalorder %s184, %s185
      %p199 = scmp.eq.s32.totalorder %s20, 1
      %p200 = por %p198, %p199
      %p202 = scmp.ne.s32.totalorder %s185, %s201
      %p203 = scmp.eq.s32.totalorder %s20, 0
      %p204 = por %p202, %p203
      %p205 = scmp.le.s32.totalorder 1, %s14
      %p206 = scmp.lt.s32.totalorder %s14, 3
      %p207 = pnand %p205, %p206
      %p208 = pneg %p207
      // Predicated region
      $region9: #{mc_upsample_forward.2} parent=5 // pred_check
        _
      $region10: #{mc_upsample_forward.2} parent=5 // pred_check_branch
        %210 = sbr.rel (%p207) target = $region12
      $region11: #{mc_upsample_forward.2} parent=5 // pred_region
        %s211 = ssub.s32 %s14, 1
        // Predicated region
        $region13: #{mc_upsample_forward.2} parent=11 // pred_check
          %p212 = pneg %p106
        $region14: #{mc_upsample_forward.2} parent=11 // pred_check_branch
          %214 = sbr.rel (%p212) target = $region16
        $region15: #{mc_upsample_forward.2} parent=11 // pred_region
          %p215 = scmp.lt.s32.totalorder %s24, 0
          %s216 = scalar_select %p215, %s24, 0
          %s217 = smul.addr %s216, 8
          %s218 = scalar_lea.vmem %s2, %s217
        $region16: #{mc_upsample_forward.2} parent=11 // pred_fallthru
          _
        // Predicated region
        $region17: #{mc_upsample_forward.2} parent=11 // pred_check
          %p219 = pneg %p127
        $region18: #{mc_upsample_forward.2} parent=11 // pred_check_branch
          %221 = sbr.rel (%p219) target = $region20
        $region19: #{mc_upsample_forward.2} parent=11 // pred_region
          _
        $region20: #{mc_upsample_forward.2} parent=11 // pred_fallthru
          _
        // Predicated region
        $region21: #{mc_upsample_forward.2} parent=11 // pred_check
          %p222 = pneg %p148
        $region22: #{mc_upsample_forward.2} parent=11 // pred_check_branch
          %224 = sbr.rel (%p222) target = $region24
        $region23: #{mc_upsample_forward.2} parent=11 // pred_region
          %s226 = ssub.s32 32, 32
          %227 = vsyncadd [#allocation3], %s226
          %s229 = sshll.u32 %s4, 4
          %s230 = int_to_ptr.vmem [resolvable:$true] %s229
          %232 = dma.vmem_to_smem %s230, 32, [#allocation2], [#allocation3]
        $region24: #{mc_upsample_forward.2} parent=11 // pred_fallthru
          _
        // Predicated region
        $region25: #{mc_upsample_forward.2} parent=11 // pred_check
          %p233 = pneg %p169
        $region26: #{mc_upsample_forward.2} parent=11 // pred_check_branch
          %235 = sbr.rel (%p233) target = $region28
        $region27: #{mc_upsample_forward.2} parent=11 // pred_region
          %s237 = ssub.s32 16, 16
          %238 = vsyncadd [#allocation5], %s237
          %s240 = sshll.u32 %s5, 4
          %s241 = int_to_ptr.vmem [resolvable:$true] %s240
          %243 = dma.vmem_to_smem %s241, 16, [#allocation4], [#allocation5]
        $region28: #{mc_upsample_forward.2} parent=11 // pred_fallthru
          _
      $region12: #{mc_upsample_forward.2} parent=5 // pred_fallthru
        _
      %p244 = scmp.lt.s32.totalorder %s14, 2
      // Predicated region
      $region29: #{mc_upsample_forward.2} parent=5 // pred_check
        %p245 = pneg %p244
      $region30: #{mc_upsample_forward.2} parent=5 // pred_check_branch
        %247 = sbr.rel (%p245) target = $region32
      $region31: #{mc_upsample_forward.2} parent=5 // pred_region
        // Predicated region
        $region33: #{mc_upsample_forward.2} parent=31 // pred_check
          %p248 = pneg %p46
        $region34: #{mc_upsample_forward.2} parent=31 // pred_check_branch
          %250 = sbr.rel (%p248) target = $region36
        $region35: #{mc_upsample_forward.2} parent=31 // pred_region
          %p251 = scmp.lt.s32.totalorder %s21, 1
          %s252 = scalar_select %p251, %s21, 1
          %s253 = smul.addr %s252, 2
          %s254 = smul.addr %s253, 8
          %s255 = scalar_lea.vmem %s0, %s254
        $region36: #{mc_upsample_forward.2} parent=31 // pred_fallthru
          _
        // Predicated region
        $region37: #{mc_upsample_forward.2} parent=31 // pred_check
          %p256 = pneg %p74
        $region38: #{mc_upsample_forward.2} parent=31 // pred_check_branch
          %258 = sbr.rel (%p256) target = $region40
        $region39: #{mc_upsample_forward.2} parent=31 // pred_region
          %p259 = scmp.lt.s32.totalorder %s21, 1
          %s260 = scalar_select %p259, %s21, 1
          %p261 = scmp.lt.s32.totalorder %s22, 0
          %s262 = scalar_select %p261, %s22, 0
          %s263 = smul.addr %s260, 8
          %s264 = sadd.s32 %s262, %s263
          %s265 = smul.addr %s264, 4
          %s266 = scalar_lea.vmem %s1, %s265
        $region40: #{mc_upsample_forward.2} parent=31 // pred_fallthru
          _
      $region32: #{mc_upsample_forward.2} parent=5 // pred_fallthru
        _
      %p267 = scmp.le.s32.totalorder 1, %s14
      %p268 = scmp.lt.s32.totalorder %s14, 3
      %p269 = pnand %p267, %p268
      %p270 = pneg %p269
      // Predicated region
      $region41: #{mc_upsample_forward.2} parent=5 // pred_check
        _
      $region42: #{mc_upsample_forward.2} parent=5 // pred_check_branch
        %272 = sbr.rel (%p269) target = $region44
      $region43: #{mc_upsample_forward.2} parent=5 // pred_region
        %s273 = ssub.s32 %s14, 1
        // Predicated region
        $region45: #{mc_upsample_forward.2} parent=43 // pred_check
          %p274 = pneg %p148
        $region46: #{mc_upsample_forward.2} parent=43 // pred_check_branch
          %276 = sbr.rel (%p274) target = $region48
        $region47: #{mc_upsample_forward.2} parent=43 // pred_region
          %277 = dma.done [#allocation3], 32
        $region48: #{mc_upsample_forward.2} parent=43 // pred_fallthru
          _
        // Predicated region
        $region49: #{mc_upsample_forward.2} parent=43 // pred_check
          %p278 = pneg %p169
        $region50: #{mc_upsample_forward.2} parent=43 // pred_check_branch
          %280 = sbr.rel (%p278) target = $region52
        $region51: #{mc_upsample_forward.2} parent=43 // pred_region
          %281 = dma.done [#allocation5], 16
        $region52: #{mc_upsample_forward.2} parent=43 // pred_fallthru
          _
        %282 = sfence
        %p283 = scmp.lt.s32.totalorder %s23, 1
        %s284 = scalar_select %p283, %s23, 1
        %s285 = smul.addr %s284, 2
        %s286 = smul.addr %s285, 8
        %s287 = scalar_lea.vmem %s0, %s286
        %p288 = pneg %p52
        %p289 = pneg %p49
        %p290 = scmp.lt.s32.totalorder %s23, 1
        %s291 = scalar_select %p290, %s23, 1
        %p292 = scmp.lt.s32.totalorder %s24, 0
        %s293 = scalar_select %p292, %s24, 0
        %s294 = smul.addr %s291, 8
        %s295 = sadd.s32 %s293, %s294
        %s296 = smul.addr %s295, 4
        %s297 = scalar_lea.vmem %s1, %s296
        %p298 = pneg %p80
        %p299 = pneg %p77
        %p300 = scmp.lt.s32.totalorder %s24, 0
        %s301 = scalar_select %p300, %s24, 0
        %s302 = smul.addr %s301, 8
        %s303 = scalar_lea.vmem %s2, %s302
        %p304 = pneg %p106
        %p305 = pneg %p103
        %p306 = pneg %p127
        %p307 = pneg %p124
        %p308 = pneg %p148
        %p309 = pneg %p145
        %p310 = pneg %p169
        %p311 = pneg %p166
        %p312 = pneg %p197
        %p313 = pneg %p194
        %p314 = scmp.lt.s32.totalorder %s23, 1
        %s315 = scalar_select %p314, %s23, 1
        %p316 = scmp.lt.s32.totalorder %s24, 0
        %s317 = scalar_select %p316, %s24, 0
        %s318 = smul.addr %s315, 4
        %s319 = sadd.s32 %s317, %s318
        %s320 = smul.addr %s319, 4
        %s321 = scalar_lea.vmem %s6, %s320
        %p322 = scmp.lt.s32.totalorder %s23, 1
        %s323 = scalar_select %p322, %s23, 1
        %s324 = smul.addr %s323, 2
        %s325 = smul.addr %s324, 8
        %s326 = scalar_lea.vmem %s0, %s325
        %p327 = scmp.lt.s32.totalorder %s23, 1
        %s328 = scalar_select %p327, %s23, 1
        %p329 = scmp.lt.s32.totalorder %s24, 0
        %s330 = scalar_select %p329, %s24, 0
        %s331 = smul.addr %s328, 8
        %s332 = sadd.s32 %s330, %s331
        %s333 = smul.addr %s332, 4
        %s334 = scalar_lea.vmem %s1, %s333
        %p335 = scmp.lt.s32.totalorder %s24, 0
        %s336 = scalar_select %p335, %s24, 0
        %s337 = smul.addr %s336, 8
        %s338 = scalar_lea.vmem %s2, %s337
        %p339 = scmp.lt.s32.totalorder %s23, 1
        %s340 = scalar_select %p339, %s23, 1
        %p341 = scmp.lt.s32.totalorder %s24, 0
        %s342 = scalar_select %p341, %s24, 0
        %s343 = smul.addr %s340, 4
        %s344 = sadd.s32 %s342, %s343
        %s345 = smul.addr %s344, 4
        %s346 = scalar_lea.vmem %s6, %s345
        %v347 = vld [vmem:[%s326] sm:$0xff]
        %v348 = vld [vmem:[%s326 + $0x8] sm:$0xff]
        %v349 = vld [vmem:[%s338] sm:$0xff]
        %vm350 = vcmask 64512
        %v352 = vsel %vm350, %v347, 0
        %v355 = vsel %vm350, %v348, 0
        %357 = vmatprep.subr.mxu0 0.0
        %358 = vmatpush1.msra.mxu0 %v349
        %359 = vmatprep.subr.mxu0 0.0
        %360 = vmatpush1.msra.mxu0 0.0
        %361 = vmatprep.subr.mxu0 0.0
        %362 = vmatpush1.msra.mxu0 0.0
        %363 = vmatprep.subr.mxu0 0.0
        %364 = vmatpush1.msra.mxu0 0.0
        %365 = vmatprep.subr.mxu0 0.0
        %366 = vmatpush1.msra.mxu0 0.0
        %367 = vmatprep.subr.mxu0 0.0
        %368 = vmatpush1.msra.mxu0 0.0
        %369 = vmatprep.subr.mxu0 0.0
        %370 = vmatpush1.msra.mxu0 0.0
        %371 = vmatprep.subr.mxu0 0.0
        %372 = vmatpush1.msra.mxu0 0.0
        %373 = vmatprep.subr.mxu0 0.0
        %374 = vmatpush1.msra.mxu0 0.0
        %375 = vmatprep.subr.mxu0 0.0
        %376 = vmatpush1.msra.mxu0 0.0
        %377 = vmatprep.subr.mxu0 0.0
        %378 = vmatpush1.msra.mxu0 0.0
        %379 = vmatprep.subr.mxu0 0.0
        %380 = vmatpush1.msra.mxu0 0.0
        %381 = vmatprep.subr.mxu0 0.0
        %382 = vmatpush1.msra.mxu0 0.0
        %383 = vmatprep.subr.mxu0 0.0
        %384 = vmatpush1.msra.mxu0 0.0
        %385 = vmatprep.subr.mxu0 0.0
        %386 = vmatpush1.msra.mxu0 0.0
        %387 = vmatprep.subr.mxu0 0.0
        %388 = vmatpush1.msra.mxu0 0.0
        %389 = vmatprep.subr.mxu0 0.0
        %390 = vmatpush1.msra.mxu0 0.0
        %391 = vmatprep.subr.mxu0 0.0
        %392 = vmatpush1.msra.mxu0 0.0
        %393 = vmatprep.subr.mxu0 0.0
        %394 = vmatpush1.msra.mxu0 0.0
        %395 = vmatprep.subr.mxu0 0.0
        %396 = vmatpush1.msra.mxu0 0.0
        %397 = vmatprep.subr.mxu0 0.0
        %398 = vmatpush1.msra.mxu0 0.0
        %399 = vmatprep.subr.mxu0 0.0
        %400 = vmatpush1.msra.mxu0 0.0
        %401 = vmatprep.subr.mxu0 0.0
        %402 = vmatpush1.msra.mxu0 0.0
        %403 = vmatprep.subr.mxu0 0.0
        %404 = vmatpush1.msra.mxu0 0.0
        %405 = vmatprep.subr.mxu0 0.0
        %406 = vmatpush1.msra.mxu0 0.0
        %407 = vmatprep.subr.mxu0 0.0
        %408 = vmatpush1.msra.mxu0 0.0
        %409 = vmatprep.subr.mxu0 0.0
        %410 = vmatpush1.msra.mxu0 0.0
        %411 = vmatprep.subr.mxu0 0.0
        %412 = vmatpush1.msra.mxu0 0.0
        %413 = vmatprep.subr.mxu0 0.0
        %414 = vmatpush1.msra.mxu0 0.0
        %415 = vmatprep.subr.mxu0 0.0
        %416 = vmatpush1.msra.mxu0 0.0
        %417 = vmatprep.subr.mxu0 0.0
        %418 = vmatpush1.msra.mxu0 0.0
        %419 = vmatprep.subr.mxu0 0.0
        %420 = vmatpush1.msra.mxu0 0.0
        %421 = vmatprep.mubr.f32.mxu0 0.0
        %422 = vmatmul.mubr.f32.gmra.mrb[0].mxu0 %v352
        %v423 = vpop.f32.mrb[0].mxu0
        %v424 = vadd.f32 0.0, %v423
        %v425 = vpop.f32.mrb[0].mxu0
        %426 = vmatprep.mubr.f32.mxu0 0.0
        %427 = vmatmul.mubr.f32.gmra.mrb[0].mxu0 %v355
        %v428 = vpop.f32.mrb[0].mxu0
        %v429 = vadd.f32 0.0, %v428
        %v430 = vpop.f32.mrb[0].mxu0
        %431 = vdwg.mxu0
        %v432 = vld [vmem:[%s3] sm:$0xff]
        %v433 = vld [vmem:[%s3 + $0x8] sm:$0xff]
        %s434 = sld [smem:[#allocation4]]
        %v435 = vstv %s434
        %v437 = vsel %vm350, %v432, 0
        %v440 = vsel %vm350, %v433, 0
        %442 = vmatprep.subr.mxu0 0.0
        %443 = vmatpush1.msra.mxu0 %v424
        %444 = vmatprep.subr.mxu0 0.0
        %445 = vmatpush1.msra.mxu0 0.0
        %446 = vmatprep.subr.mxu0 0.0
        %447 = vmatpush1.msra.mxu0 0.0
        %448 = vmatprep.subr.mxu0 0.0
        %449 = vmatpush1.msra.mxu0 0.0
        %450 = vmatprep.subr.mxu0 0.0
        %451 = vmatpush1.msra.mxu0 0.0
        %452 = vmatprep.subr.mxu0 0.0
        %453 = vmatpush1.msra.mxu0 0.0
        %454 = vmatprep.subr.mxu0 0.0
        %455 = vmatpush1.msra.mxu0 0.0
        %456 = vmatprep.subr.mxu0 0.0
        %457 = vmatpush1.msra.mxu0 0.0
        %458 = vmatprep.subr.mxu0 0.0
        %459 = vmatpush1.msra.mxu0 0.0
        %460 = vmatprep.subr.mxu0 0.0
        %461 = vmatpush1.msra.mxu0 0.0
        %462 = vmatprep.subr.mxu0 0.0
        %463 = vmatpush1.msra.mxu0 0.0
        %464 = vmatprep.subr.mxu0 0.0
        %465 = vmatpush1.msra.mxu0 0.0
        %466 = vmatprep.subr.mxu0 0.0
        %467 = vmatpush1.msra.mxu0 0.0
        %468 = vmatprep.subr.mxu0 0.0
        %469 = vmatpush1.msra.mxu0 0.0
        %470 = vmatprep.subr.mxu0 0.0
        %471 = vmatpush1.msra.mxu0 0.0
        %472 = vmatprep.subr.mxu0 0.0
        %473 = vmatpush1.msra.mxu0 0.0
        %474 = vmatprep.subr.mxu0 0.0
        %475 = vmatpush1.msra.mxu0 0.0
        %476 = vmatprep.subr.mxu0 0.0
        %477 = vmatpush1.msra.mxu0 0.0
        %478 = vmatprep.subr.mxu0 0.0
        %479 = vmatpush1.msra.mxu0 0.0
        %480 = vmatprep.subr.mxu0 0.0
        %481 = vmatpush1.msra.mxu0 0.0
        %482 = vmatprep.subr.mxu0 0.0
        %483 = vmatpush1.msra.mxu0 0.0
        %484 = vmatprep.subr.mxu0 0.0
        %485 = vmatpush1.msra.mxu0 0.0
        %486 = vmatprep.subr.mxu0 0.0
        %487 = vmatpush1.msra.mxu0 0.0
        %488 = vmatprep.subr.mxu0 0.0
        %489 = vmatpush1.msra.mxu0 0.0
        %490 = vmatprep.subr.mxu0 0.0
        %491 = vmatpush1.msra.mxu0 0.0
        %492 = vmatprep.subr.mxu0 0.0
        %493 = vmatpush1.msra.mxu0 0.0
        %494 = vmatprep.subr.mxu0 0.0
        %495 = vmatpush1.msra.mxu0 0.0
        %496 = vmatprep.subr.mxu0 0.0
        %497 = vmatpush1.msra.mxu0 0.0
        %498 = vmatprep.subr.mxu0 0.0
        %499 = vmatpush1.msra.mxu0 0.0
        %500 = vmatprep.subr.mxu0 0.0
        %501 = vmatpush1.msra.mxu0 0.0
        %502 = vmatprep.subr.mxu0 0.0
        %503 = vmatpush1.msra.mxu0 0.0
        %504 = vmatprep.subr.mxu0 0.0
        %505 = vmatpush1.msra.mxu0 0.0
        %506 = vmatprep.mubr.f32.mxu0 0.0
        %507 = vmatmul.mubr.f32.gmra.mrb[0].mxu0 %v437
        %v508 = vpop.f32.mrb[0].mxu0
        %v509 = vadd.f32 %v435, %v508
        %v510 = vpop.f32.mrb[0].mxu0
        %511 = vmatprep.mubr.f32.mxu0 0.0
        %512 = vmatmul.mubr.f32.gmra.mrb[0].mxu0 %v440
        %v513 = vpop.f32.mrb[0].mxu0
        %v514 = vadd.f32 %v435, %v513
        %v515 = vpop.f32.mrb[0].mxu0
        %516 = vdwg.mxu0
        %s517 = sld [smem:[#allocation2]]
        %v518 = vld [vmem:[%s334] sm:$0xf]
        %v519 = vld [vmem:[%s334 + $0x4] sm:$0xf]
        %v520 = vunpack.c.l.bf16 %v518
        %v521 = vunpack.c.l.bf16 %v519
        %v522 = vstv %s517
        %v523 = vmul.f32 %v522, %v520
        %v524 = vmul.f32 %v522, %v521
        %v525 = vadd.f32 %v509, %v523
        %v526 = vadd.f32 %v514, %v524
        %s527 = sld [smem:[#allocation2 + $0x1]]
        %s528 = scalar_lea.vmem %s334, 8
        %v529 = vld [vmem:[%s528] sm:$0xf]
        %v530 = vld [vmem:[%s528 + $0x4] sm:$0xf]
        %v531 = vunpack.c.l.bf16 %v529
        %v532 = vunpack.c.l.bf16 %v530
        %v533 = vstv %s527
        %v534 = vmul.f32 %v533, %v531
        %v535 = vmul.f32 %v533, %v532
        %v536 = vadd.f32 %v525, %v534
        %v537 = vadd.f32 %v526, %v535
        %s538 = sld [smem:[#allocation2 + $0x2]]
        %s539 = scalar_lea.vmem %s334, 16
        %v540 = vld [vmem:[%s539] sm:$0xf]
        %v541 = vld [vmem:[%s539 + $0x4] sm:$0xf]
        %v542 = vunpack.c.l.bf16 %v540
        %v543 = vunpack.c.l.bf16 %v541
        %v544 = vstv %s538
        %v545 = vmul.f32 %v544, %v542
        %v546 = vmul.f32 %v544, %v543
        %v547 = vadd.f32 %v536, %v545
        %v548 = vadd.f32 %v537, %v546
        %s549 = sld [smem:[#allocation2 + $0x3]]
        %s550 = scalar_lea.vmem %s334, 24
        %v551 = vld [vmem:[%s550] sm:$0xf]
        %v552 = vld [vmem:[%s550 + $0x4] sm:$0xf]
        %v553 = vunpack.c.l.bf16 %v551
        %v554 = vunpack.c.l.bf16 %v552
        %v555 = vstv %s549
        %v556 = vmul.f32 %v555, %v553
        %v557 = vmul.f32 %v555, %v554
        %v558 = vadd.f32 %v547, %v556
        %v559 = vadd.f32 %v548, %v557
        %v560 = vpack.c.bf16 %v559, %v558
        %v562 = vunpack.c.l.b16 %v560
        %v563 = vunpack.c.h.b16 %v560
        %v564 = vpack.c.b16 %v562, %v562
        %v565 = vpack.c.b16 %v563, %v563
        %vm568 = vcmask 125952
        %569 = vst.msk [vmem:[%s346] sm:$0xf] %vm568, %v564
        %570 = vst.msk [vmem:[%s346 + $0x4] sm:$0xf] %vm568, %v565
        %s571 = sld [smem:[#allocation4 + $0x1]]
        %v572 = vstv %s571
        %573 = vmatprep.subr.mxu0 0.0
        %574 = vmatpush1.msra.mxu0 %v429
        %575 = vmatprep.subr.mxu0 0.0
        %576 = vmatpush1.msra.mxu0 0.0
        %577 = vmatprep.subr.mxu0 0.0
        %578 = vmatpush1.msra.mxu0 0.0
        %579 = vmatprep.subr.mxu0 0.0
        %580 = vmatpush1.msra.mxu0 0.0
        %581 = vmatprep.subr.mxu0 0.0
        %582 = vmatpush1.msra.mxu0 0.0
        %583 = vmatprep.subr.mxu0 0.0
        %584 = vmatpush1.msra.mxu0 0.0
        %585 = vmatprep.subr.mxu0 0.0
        %586 = vmatpush1.msra.mxu0 0.0
        %587 = vmatprep.subr.mxu0 0.0
        %588 = vmatpush1.msra.mxu0 0.0
        %589 = vmatprep.subr.mxu0 0.0
        %590 = vmatpush1.msra.mxu0 0.0
        %591 = vmatprep.subr.mxu0 0.0
        %592 = vmatpush1.msra.mxu0 0.0
        %593 = vmatprep.subr.mxu0 0.0
        %594 = vmatpush1.msra.mxu0 0.0
        %595 = vmatprep.subr.mxu0 0.0
        %596 = vmatpush1.msra.mxu0 0.0
        %597 = vmatprep.subr.mxu0 0.0
        %598 = vmatpush1.msra.mxu0 0.0
        %599 = vmatprep.subr.mxu0 0.0
        %600 = vmatpush1.msra.mxu0 0.0
        %601 = vmatprep.subr.mxu0 0.0
        %602 = vmatpush1.msra.mxu0 0.0
        %603 = vmatprep.subr.mxu0 0.0
        %604 = vmatpush1.msra.mxu0 0.0
        %605 = vmatprep.subr.mxu0 0.0
        %606 = vmatpush1.msra.mxu0 0.0
        %607 = vmatprep.subr.mxu0 0.0
        %608 = vmatpush1.msra.mxu0 0.0
        %609 = vmatprep.subr.mxu0 0.0
        %610 = vmatpush1.msra.mxu0 0.0
        %611 = vmatprep.subr.mxu0 0.0
        %612 = vmatpush1.msra.mxu0 0.0
        %613 = vmatprep.subr.mxu0 0.0
        %614 = vmatpush1.msra.mxu0 0.0
        %615 = vmatprep.subr.mxu0 0.0
        %616 = vmatpush1.msra.mxu0 0.0
        %617 = vmatprep.subr.mxu0 0.0
        %618 = vmatpush1.msra.mxu0 0.0
        %619 = vmatprep.subr.mxu0 0.0
        %620 = vmatpush1.msra.mxu0 0.0
        %621 = vmatprep.subr.mxu0 0.0
        %622 = vmatpush1.msra.mxu0 0.0
        %623 = vmatprep.subr.mxu0 0.0
        %624 = vmatpush1.msra.mxu0 0.0
        %625 = vmatprep.subr.mxu0 0.0
        %626 = vmatpush1.msra.mxu0 0.0
        %627 = vmatprep.subr.mxu0 0.0
        %628 = vmatpush1.msra.mxu0 0.0
        %629 = vmatprep.subr.mxu0 0.0
        %630 = vmatpush1.msra.mxu0 0.0
        %631 = vmatprep.subr.mxu0 0.0
        %632 = vmatpush1.msra.mxu0 0.0
        %633 = vmatprep.subr.mxu0 0.0
        %634 = vmatpush1.msra.mxu0 0.0
        %635 = vmatprep.subr.mxu0 0.0
        %636 = vmatpush1.msra.mxu0 0.0
        %637 = vmatprep.mubr.f32.mxu0 0.0
        %638 = vmatmul.mubr.f32.gmra.mrb[0].mxu0 %v437
        %v639 = vpop.f32.mrb[0].mxu0
        %v640 = vadd.f32 %v572, %v639
        %v641 = vpop.f32.mrb[0].mxu0
        %642 = vmatprep.mubr.f32.mxu0 0.0
        %643 = vmatmul.mubr.f32.gmra.mrb[0].mxu0 %v440
        %v644 = vpop.f32.mrb[0].mxu0
        %v645 = vadd.f32 %v572, %v644
        %v646 = vpop.f32.mrb[0].mxu0
        %647 = vdwg.mxu0
        %s648 = sld [smem:[#allocation2 + $0x80]]
        %v649 = vld [vmem:[%s334] sm:$0xf]
        %v650 = vld [vmem:[%s334 + $0x4] sm:$0xf]
        %v651 = vunpack.c.l.bf16 %v649
        %v652 = vunpack.c.l.bf16 %v650
        %v653 = vstv %s648
        %v654 = vmul.f32 %v653, %v651
        %v655 = vmul.f32 %v653, %v652
        %v656 = vadd.f32 %v640, %v654
        %v657 = vadd.f32 %v645, %v655
        %s658 = sld [smem:[#allocation2 + $0x81]]
        %v659 = vld [vmem:[%s528] sm:$0xf]
        %v660 = vld [vmem:[%s528 + $0x4] sm:$0xf]
        %v661 = vunpack.c.l.bf16 %v659
        %v662 = vunpack.c.l.bf16 %v660
        %v663 = vstv %s658
        %v664 = vmul.f32 %v663, %v661
        %v665 = vmul.f32 %v663, %v662
        %v666 = vadd.f32 %v656, %v664
        %v667 = vadd.f32 %v657, %v665
        %s668 = sld [smem:[#allocation2 + $0x82]]
        %v669 = vld [vmem:[%s539] sm:$0xf]
        %v670 = vld [vmem:[%s539 + $0x4] sm:$0xf]
        %v671 = vunpack.c.l.bf16 %v669
        %v672 = vunpack.c.l.bf16 %v670
        %v673 = vstv %s668
        %v674 = vmul.f32 %v673, %v671
        %v675 = vmul.f32 %v673, %v672
        %v676 = vadd.f32 %v666, %v674
        %v677 = vadd.f32 %v667, %v675
        %s678 = sld [smem:[#allocation2 + $0x83]]
        %v679 = vld [vmem:[%s550] sm:$0xf]
        %v680 = vld [vmem:[%s550 + $0x4] sm:$0xf]
        %v681 = vunpack.c.l.bf16 %v679
        %v682 = vunpack.c.l.bf16 %v680
        %v683 = vstv %s678
        %v684 = vmul.f32 %v683, %v681
        %v685 = vmul.f32 %v683, %v682
        %v686 = vadd.f32 %v676, %v684
        %v687 = vadd.f32 %v677, %v685
        %v688 = vpack.c.bf16 %v687, %v686
        %v690 = vunpack.c.l.b16 %v688
        %v691 = vunpack.c.h.b16 %v688
        %v692 = vpack.c.b16 %v690, %v690
        %v693 = vpack.c.b16 %v691, %v691
        %s696 = scalar_lea.vmem %s346, 8
        %697 = vst.msk [vmem:[%s696] sm:$0xf] %vm568, %v692
        %698 = vst.msk [vmem:[%s696 + $0x4] sm:$0xf] %vm568, %v693
        %p699 = scmp.lt.s32.totalorder %s23, 1
        %s700 = scalar_select %p699, %s23, 1
        %p701 = scmp.lt.s32.totalorder %s24, 0
        %s702 = scalar_select %p701, %s24, 0
        %s703 = smul.addr %s700, 4
        %s704 = sadd.s32 %s702, %s703
        %s705 = smul.addr %s704, 4
        %s706 = scalar_lea.vmem %s6, %s705
        // Predicated region
        $region53: #{mc_upsample_forward.2} parent=43 // pred_check
          %p707 = pneg %p194
        $region54: #{mc_upsample_forward.2} parent=43 // pred_check_branch
          %709 = sbr.rel (%p707) target = $region56
        $region55: #{mc_upsample_forward.2} parent=43 // pred_region
          _
        $region56: #{mc_upsample_forward.2} parent=43 // pred_fallthru
          _
      $region44: #{mc_upsample_forward.2} parent=5 // pred_fallthru
        _
      %p710 = scmp.le.s32.totalorder 2, %s14
      // Predicated region
      $region57: #{mc_upsample_forward.2} parent=5 // pred_check
        %p711 = pneg %p710
      $region58: #{mc_upsample_forward.2} parent=5 // pred_check_branch
        %713 = sbr.rel (%p711) target = $region60
      $region59: #{mc_upsample_forward.2} parent=5 // pred_region
        %s714 = ssub.s32 %s14, 2
        // Predicated region
        $region61: #{mc_upsample_forward.2} parent=59 // pred_check
          %p715 = pneg %p200
        $region62: #{mc_upsample_forward.2} parent=59 // pred_check_branch
          %717 = sbr.rel (%p715) target = $region64
        $region63: #{mc_upsample_forward.2} parent=59 // pred_region
          %p718 = scmp.lt.s32.totalorder %s25, 1
          %s719 = scalar_select %p718, %s25, 1
          %p720 = scmp.lt.s32.totalorder %s26, 0
          %s721 = scalar_select %p720, %s26, 0
          %s722 = smul.addr %s719, 4
          %s723 = sadd.s32 %s721, %s722
          %s724 = smul.addr %s723, 4
          %s725 = scalar_lea.vmem %s6, %s724
        $region64: #{mc_upsample_forward.2} parent=59 // pred_fallthru
          _
      $region60: #{mc_upsample_forward.2} parent=5 // pred_fallthru
        _
    $region6: #{mc_upsample_forward.2} parent=1 // loop_footer
      %s18 = sadd.s32 1, %s14
    $region7: #{mc_upsample_forward.2} parent=1 // loop_footer_branch
      %13 = sbr.rel target = $region3
    $region8: #{mc_upsample_forward.2} parent=1 // loop_exit
      _
    %726 = vsyncpa [#allocation3], 1
    %s727 = scalar_lea.sflag [#allocation3], 1
    %728 = vsyncpa %s727, 1
    %729 = vsyncpa [#allocation5], 1

// kernel: mc_upsample_forward.3
$region0: #{mc_upsample_forward.3}
  #allocation0 [shape = 'u32[]', space=smem, size = 0x4, offset = 0x4, fixed_abs, tag = 'smem constant byte address 0x4 - core index']
  #allocation1 [shape = 'u32[144,128]{1,0:T(1,128)}', space=vmem, size = 0x12000, scoped, tag = 'internal scratch']
  %s0 = inlined_call_operand.vmem [shape: f32[2,32,16], index: 0, kind: input, shape index: {}]
  %s1 = inlined_call_operand.vmem [shape: bf16[2,2,32,32], index: 1, kind: input, shape index: {}]
  %s2 = inlined_call_operand.vmem [shape: f32[16,32], index: 2, kind: input, shape index: {}]
  %s3 = inlined_call_operand.vmem [shape: f32[32,16], index: 3, kind: input, shape index: {}]
  %s4 = inlined_call_operand.vmem [shape: f32[2,2], index: 4, kind: input, shape index: {}]
  %s5 = inlined_call_operand.vmem [shape: f32[2], index: 5, kind: input, shape index: {}]
  %s6 = inlined_call_operand.hbm [shape: bf16[2,2,32,32], index: 6, kind: output, shape index: {}]
  %s7 = sld [smem:[#allocation0]]
  $region65: #{mc_upsample_forward.3} parent=0
    _
  %s9 = ssub.s32 1, %s7
  %s10 = scalar_select 0, %s9, %s7
  $region1: #{mc_upsample_forward.3} parent=0
    #allocation2 [shape = 'u8[1024]{0}', space=smem, size = 0x400, scoped, tag = 'input window, operand 4, single buffered']
    #allocation3 [shape = 's32[2]{0}', space=sflag, size = 0x8, scoped, tag = 'scoped memory for mc_upsample_forward.3']
    #allocation4 [shape = 's32[2]{0}', space=sflag, size = 0x8, scoped, tag = 'scoped memory for mc_upsample_forward.3']
    #allocation5 [shape = 'u8[512]{0}', space=smem, size = 0x200, scoped, tag = 'input window, operand 5, single buffered']
    #allocation6 [shape = 's32[1]{0}', space=sflag, size = 0x4, scoped, tag = 'scoped memory for mc_upsample_forward.3']
    #allocation7 [shape = 'u8[32768]{0}', space=vmem, size = 0x8000, scoped, tag = 'output window, operand 0']
    %11 = vsyncpa [#allocation4], 0
    %12 = vsyncpa [#allocation6], 0
    %13 = vsyncpa [#allocation3], 0
    %s14 = scalar_lea.sflag [#allocation3], 1
    %15 = vsyncpa %s14, 0
    loop: start=0, step=1, limit=4
    $region2: #{mc_upsample_forward.3} parent=1 // loop_pre_header
      _
    $region3: #{mc_upsample_forward.3} parent=1 // loop_header
      %s17 = sphi 0, %s21
      %p18 = scmp.ge.s32.totalorder %s17, 4
      %s24 = sphi 0, %s36
      %s25 = sphi 0, %s32
      %s26 = sphi 0, %s24
      %s27 = sphi 0, %s25
      %s28 = sphi 0, %s26
      %s29 = sphi 0, %s27
      %s39 = sphi 0, %s41
      %s42 = sphi 0, %s39
      %s43 = sphi 0, %s42
      %s59 = sphi 0, %s43
      %s67 = sphi 0, %s69
      %s70 = sphi 0, %s67
      %s71 = sphi 0, %s70
      %s87 = sphi 0, %s71
      %s93 = sphi 0, %s95
      %s96 = sphi 0, %s93
      %s97 = sphi 0, %s96
      %s113 = sphi 0, %s97
      %s117 = sphi 0, %s117
      %s119 = sphi 0, %s117
      %s120 = sphi 0, %s119
      %s134 = sphi 0, %s120
      %s138 = sphi 0, %s138
      %s140 = sphi 0, %s138
      %s141 = sphi 0, %s140
      %s155 = sphi 0, %s141
      %s159 = sphi 0, %s159
      %s161 = sphi 0, %s159
      %s162 = sphi 0, %s161
      %s176 = sphi 0, %s162
      %s184 = sphi 0, %s186
      %s187 = sphi 0, %s184
      %s188 = sphi 0, %s187
      %s204 = sphi 0, %s188
    $region4: #{mc_upsample_forward.3} parent=1 // loop_header_branch
      %20 = sbr.rel (%p18) target = $region8
    $region5: #{mc_upsample_forward.3} parent=1 // loop_body
      %s22 = ssub.s32 %s17, 1
      %s23 = ssub.s32 %s17, 2
      %s30 = sadd.s32 1, %s25
      %p31 = scmp.ge.s32.totalorder %s30, 1
      %s32 = scalar_select %p31, 0, %s30
      %s33 = sadd.s32 1, %s24
      %s34 = scalar_select %p31, %s33, %s24
      %p35 = scmp.ge.s32.totalorder %s34, 2
      %s36 = scalar_select %p35, 0, %s34
      %s37 = ssub.s32 %s24, %s36
      %p38 = scmp.eq.s32.totalorder %s37, 0
      %s40 = sadd.s32 %s39, 1
      %s41 = scalar_select %p38, %s39, %s40
      %p44 = pneg %p38
      %p45 = scmp.eq.s32.totalorder %s17, 1
      %p46 = por %p44, %p45
      %p47 = scmp.ne.s32.totalorder %s39, %s42
      %p48 = scmp.eq.s32.totalorder %s17, 0
      %p49 = por %p47, %p48
      %p50 = scmp.ne.s32.totalorder %s39, %s42
      %p51 = scmp.eq.s32.totalorder %s22, 1
      %p52 = por %p50, %p51
      %p53 = scmp.ne.s32.totalorder %s42, %s43
      %p54 = scmp.eq.s32.totalorder %s22, 0
      %p55 = por %p53, %p54
      %p56 = scmp.ne.s32.totalorder %s42, %s43
      %p57 = scmp.eq.s32.totalorder %s23, 1
      %p58 = por %p56, %p57
      %p60 = scmp.ne.s32.totalorder %s43, %s59
      %p61 = scmp.eq.s32.totalorder %s23, 0
      %p62 = por %p60, %p61
      %s63 = ssub.s32 %s24, %s36
      %s64 = ssub.s32 %s25, %s32
      %s65 = sor.u32 %s63, %s64
      %p66 = scmp.eq.s32.totalorder %s65, 0
      %s68 = sadd.s32 %s67, 1
      %s69 = scalar_select %p66, %s67, %s68
      %p72 = pneg %p66
      %p73 = scmp.eq.s32.totalorder %s17, 1
      %p74 = por %p72, %p73
      %p75 = scmp.ne.s32.totalorder %s67, %s70
      %p76 = scmp.eq.s32.totalorder %s17, 0
      %p77 = por %p75, %p76
      %p78 = scmp.ne.s32.totalorder %s67, %s70
      %p79 = scmp.eq.s32.totalorder %s22, 1
      %p80 = por %p78, %p79
      %p81 = scmp.ne.s32.totalorder %s70, %s71
      %p82 = scmp.eq.s32.totalorder %s22, 0
      %p83 = por %p81, %p82
      %p84 = scmp.ne.s32.totalorder %s70, %s71
      %p85 = scmp.eq.s32.totalorder %s23, 1
      %p86 = por %p84, %p85
      %p88 = scmp.ne.s32.totalorder %s71, %s87
      %p89 = scmp.eq.s32.totalorder %s23, 0
      %p90 = por %p88, %p89
      %s91 = ssub.s32 %s25, %s32
      %p92 = scmp.eq.s32.totalorder %s91, 0
      %s94 = sadd.s32 %s93, 1
      %s95 = scalar_select %p92, %s93, %s94
      %p98 = pneg %p92
      %p99 = scmp.eq.s32.totalorder %s17, 1
      %p100 = por %p98, %p99
      %p101 = scmp.ne.s32.totalorder %s93, %s96
      %p102 = scmp.eq.s32.totalorder %s17, 0
      %p103 = por %p101, %p102
      %p104 = scmp.ne.s32.totalorder %s93, %s96
      %p105 = scmp.eq.s32.totalorder %s22, 1
      %p106 = por %p104, %p105
      %p107 = scmp.ne.s32.totalorder %s96, %s97
      %p108 = scmp.eq.s32.totalorder %s22, 0
      %p109 = por %p107, %p108
      %p110 = scmp.ne.s32.totalorder %s96, %s97
      %p111 = scmp.eq.s32.totalorder %s23, 1
      %p112 = por %p110, %p111
      %p114 = scmp.ne.s32.totalorder %s97, %s113
      %p115 = scmp.eq.s32.totalorder %s23, 0
      %p116 = por %p114, %p115
      %s118 = sadd.s32 %s117, 1
      %p121 = scmp.eq.s32.totalorder %s17, 1
      %p122 = scmp.ne.s32.totalorder %s117, %s119
      %p123 = scmp.eq.s32.totalorder %s17, 0
      %p124 = por %p122, %p123
      %p125 = scmp.ne.s32.totalorder %s117, %s119
      %p126 = scmp.eq.s32.totalorder %s22, 1
      %p127 = por %p125, %p126
      %p128 = scmp.ne.s32.totalorder %s119, %s120
      %p129 = scmp.eq.s32.totalorder %s22, 0
      %p130 = por %p128, %p129
      %p131 = scmp.ne.s32.totalorder %s119, %s120
      %p132 = scmp.eq.s32.totalorder %s23, 1
      %p133 = por %p131, %p132
      %p135 = scmp.ne.s32.totalorder %s120, %s134
      %p136 = scmp.eq.s32.totalorder %s23, 0
      %p137 = por %p135, %p136
      %s139 = sadd.s32 %s138, 1
      %p142 = scmp.eq.s32.totalorder %s17, 1
      %p143 = scmp.ne.s32.totalorder %s138, %s140
      %p144 = scmp.eq.s32.totalorder %s17, 0
      %p145 = por %p143, %p144
      %p146 = scmp.ne.s32.totalorder %s138, %s140
      %p147 = scmp.eq.s32.totalorder %s22, 1
      %p148 = por %p146, %p147
      %p149 = scmp.ne.s32.totalorder %s140, %s141
      %p150 = scmp.eq.s32.totalorder %s22, 0
      %p151 = por %p149, %p150
      %p152 = scmp.ne.s32.totalorder %s140, %s141
      %p153 = scmp.eq.s32.totalorder %s23, 1
      %p154 = por %p152, %p153
      %p156 = scmp.ne.s32.totalorder %s141, %s155
      %p157 = scmp.eq.s32.totalorder %s23, 0
      %p158 = por %p156, %p157
      %s160 = sadd.s32 %s159, 1
      %p163 = scmp.eq.s32.totalorder %s17, 1
      %p164 = scmp.ne.s32.totalorder %s159, %s161
      %p165 = scmp.eq.s32.totalorder %s17, 0
      %p166 = por %p164, %p165
      %p167 = scmp.ne.s32.totalorder %s159, %s161
      %p168 = scmp.eq.s32.totalorder %s22, 1
      %p169 = por %p167, %p168
      %p170 = scmp.ne.s32.totalorder %s161, %s162
      %p171 = scmp.eq.s32.totalorder %s22, 0
      %p172 = por %p170, %p171
      %p173 = scmp.ne.s32.totalorder %s161, %s162
      %p174 = scmp.eq.s32.totalorder %s23, 1
      %p175 = por %p173, %p174
      %p177 = scmp.ne.s32.totalorder %s162, %s176
      %p178 = scmp.eq.s32.totalorder %s23, 0
      %p179 = por %p177, %p178
      %s180 = ssub.s32 %s24, %s36
      %s181 = ssub.s32 %s25, %s32
      %s182 = sor.u32 %s180, %s181
      %p183 = scmp.eq.s32.totalorder %s182, 0
      %s185 = sadd.s32 %s184, 1
      %s186 = scalar_select %p183, %s184, %s185
      %p189 = pneg %p183
      %p190 = scmp.eq.s32.totalorder %s17, 1
      %p191 = por %p189, %p190
      %p192 = scmp.ne.s32.totalorder %s184, %s187
      %p193 = scmp.eq.s32.totalorder %s17, 0
      %p194 = por %p192, %p193
      %p195 = scmp.ne.s32.totalorder %s184, %s187
      %p196 = scmp.eq.s32.totalorder %s22, 1
      %p197 = por %p195, %p196
      %p198 = scmp.ne.s32.totalorder %s187, %s188
      %p199 = scmp.eq.s32.totalorder %s22, 0
      %p200 = por %p198, %p199
      %p201 = scmp.ne.s32.totalorder %s187, %s188
      %p202 = scmp.eq.s32.totalorder %s23, 1
      %p203 = por %p201, %p202
      %p205 = scmp.ne.s32.totalorder %s188, %s204
      %p206 = scmp.eq.s32.totalorder %s23, 0
      %p207 = por %p205, %p206
      %p208 = scmp.le.s32.totalorder 1, %s17
      %p209 = scmp.lt.s32.totalorder %s17, 3
      %p210 = pnand %p208, %p209
      %p211 = pneg %p210
      // Predicated region
      $region9: #{mc_upsample_forward.3} parent=5 // pred_check
        _
      $region10: #{mc_upsample_forward.3} parent=5 // pred_check_branch
        %213 = sbr.rel (%p210) target = $region12
      $region11: #{mc_upsample_forward.3} parent=5 // pred_region
        %s214 = ssub.s32 %s17, 1
        // Predicated region
        $region13: #{mc_upsample_forward.3} parent=11 // pred_check
          %p215 = pneg %p109
        $region14: #{mc_upsample_forward.3} parent=11 // pred_check_branch
          %217 = sbr.rel (%p215) target = $region16
        $region15: #{mc_upsample_forward.3} parent=11 // pred_region
          %p218 = scmp.lt.s32.totalorder %s27, 0
          %s219 = scalar_select %p218, %s27, 0
          %s220 = smul.addr %s219, 8
          %s221 = scalar_lea.vmem %s2, %s220
        $region16: #{mc_upsample_forward.3} parent=11 // pred_fallthru
          _
        // Predicated region
        $region17: #{mc_upsample_forward.3} parent=11 // pred_check
          %p222 = pneg %p130
        $region18: #{mc_upsample_forward.3} parent=11 // pred_check_branch
          %224 = sbr.rel (%p222) target = $region20
        $region19: #{mc_upsample_forward.3} parent=11 // pred_region
          _
        $region20: #{mc_upsample_forward.3} parent=11 // pred_fallthru
          _
        // Predicated region
        $region21: #{mc_upsample_forward.3} parent=11 // pred_check
          %p225 = pneg %p151
        $region22: #{mc_upsample_forward.3} parent=11 // pred_check_branch
          %227 = sbr.rel (%p225) target = $region24
        $region23: #{mc_upsample_forward.3} parent=11 // pred_region
          %s229 = ssub.s32 32, 32
          %230 = vsyncadd [#allocation4], %s229
          %s232 = sshll.u32 %s4, 4
          %s233 = int_to_ptr.vmem [resolvable:$true] %s232
          %235 = dma.vmem_to_smem %s233, 32, [#allocation2], [#allocation4]
        $region24: #{mc_upsample_forward.3} parent=11 // pred_fallthru
          _
        // Predicated region
        $region25: #{mc_upsample_forward.3} parent=11 // pred_check
          %p236 = pneg %p172
        $region26: #{mc_upsample_forward.3} parent=11 // pred_check_branch
          %238 = sbr.rel (%p236) target = $region28
        $region27: #{mc_upsample_forward.3} parent=11 // pred_region
          %s240 = ssub.s32 16, 16
          %241 = vsyncadd [#allocation6], %s240
          %s243 = sshll.u32 %s5, 4
          %s244 = int_to_ptr.vmem [resolvable:$true] %s243
          %246 = dma.vmem_to_smem %s244, 16, [#allocation5], [#allocation6]
        $region28: #{mc_upsample_forward.3} parent=11 // pred_fallthru
          _
      $region12: #{mc_upsample_forward.3} parent=5 // pred_fallthru
        _
      %p247 = scmp.lt.s32.totalorder %s17, 2
      // Predicated region
      $region29: #{mc_upsample_forward.3} parent=5 // pred_check
        %p248 = pneg %p247
      $region30: #{mc_upsample_forward.3} parent=5 // pred_check_branch
        %250 = sbr.rel (%p248) target = $region32
      $region31: #{mc_upsample_forward.3} parent=5 // pred_region
        // Predicated region
        $region33: #{mc_upsample_forward.3} parent=31 // pred_check
          %p251 = pneg %p49
        $region34: #{mc_upsample_forward.3} parent=31 // pred_check_branch
          %253 = sbr.rel (%p251) target = $region36
        $region35: #{mc_upsample_forward.3} parent=31 // pred_region
          %p254 = scmp.lt.s32.totalorder %s24, 1
          %s255 = scalar_select %p254, %s24, 1
          %s256 = smul.addr %s255, 4
          %s257 = smul.addr %s256, 8
          %s258 = scalar_lea.vmem %s0, %s257
        $region36: #{mc_upsample_forward.3} parent=31 // pred_fallthru
          _
        // Predicated region
        $region37: #{mc_upsample_forward.3} parent=31 // pred_check
          %p259 = pneg %p77
        $region38: #{mc_upsample_forward.3} parent=31 // pred_check_branch
          %261 = sbr.rel (%p259) target = $region40
        $region39: #{mc_upsample_forward.3} parent=31 // pred_region
          %p262 = scmp.lt.s32.totalorder %s24, 1
          %s263 = scalar_select %p262, %s24, 1
          %p264 = scmp.lt.s32.totalorder %s25, 0
          %s265 = scalar_select %p264, %s25, 0
          %s266 = smul.addr %s263, 8
          %s267 = sadd.s32 %s265, %s266
          %s268 = smul.addr %s267, 4
          %s269 = scalar_lea.vmem %s1, %s268
        $region40: #{mc_upsample_forward.3} parent=31 // pred_fallthru
          _
      $region32: #{mc_upsample_forward.3} parent=5 // pred_fallthru
        _
      %p270 = scmp.le.s32.totalorder 1, %s17
      %p271 = scmp.lt.s32.totalorder %s17, 3
      %p272 = pnand %p270, %p271
      %p273 = pneg %p272
      // Predicated region
      $region41: #{mc_upsample_forward.3} parent=5 // pred_check
        _
      $region42: #{mc_upsample_forward.3} parent=5 // pred_check_branch
        %275 = sbr.rel (%p272) target = $region44
      $region43: #{mc_upsample_forward.3} parent=5 // pred_region
        %s276 = ssub.s32 %s17, 1
        // Predicated region
        $region45: #{mc_upsample_forward.3} parent=43 // pred_check
          %p277 = pneg %p151
        $region46: #{mc_upsample_forward.3} parent=43 // pred_check_branch
          %279 = sbr.rel (%p277) target = $region48
        $region47: #{mc_upsample_forward.3} parent=43 // pred_region
          %280 = dma.done [#allocation4], 32
        $region48: #{mc_upsample_forward.3} parent=43 // pred_fallthru
          _
        // Predicated region
        $region49: #{mc_upsample_forward.3} parent=43 // pred_check
          %p281 = pneg %p172
        $region50: #{mc_upsample_forward.3} parent=43 // pred_check_branch
          %283 = sbr.rel (%p281) target = $region52
        $region51: #{mc_upsample_forward.3} parent=43 // pred_region
          %284 = dma.done [#allocation6], 16
        $region52: #{mc_upsample_forward.3} parent=43 // pred_fallthru
          _
        %285 = sfence
        %p286 = scmp.lt.s32.totalorder %s26, 1
        %s287 = scalar_select %p286, %s26, 1
        %s288 = smul.addr %s287, 4
        %s289 = smul.addr %s288, 8
        %s290 = scalar_lea.vmem %s0, %s289
        %p291 = pneg %p55
        %p292 = pneg %p52
        %p293 = scmp.lt.s32.totalorder %s26, 1
        %s294 = scalar_select %p293, %s26, 1
        %p295 = scmp.lt.s32.totalorder %s27, 0
        %s296 = scalar_select %p295, %s27, 0
        %s297 = smul.addr %s294, 8
        %s298 = sadd.s32 %s296, %s297
        %s299 = smul.addr %s298, 4
        %s300 = scalar_lea.vmem %s1, %s299
        %p301 = pneg %p83
        %p302 = pneg %p80
        %p303 = scmp.lt.s32.totalorder %s27, 0
        %s304 = scalar_select %p303, %s27, 0
        %s305 = smul.addr %s304, 8
        %s306 = scalar_lea.vmem %s2, %s305
        %p307 = pneg %p109
        %p308 = pneg %p106
        %p309 = pneg %p130
        %p310 = pneg %p127
        %p311 = pneg %p151
        %p312 = pneg %p148
        %p313 = pneg %p172
        %p314 = pneg %p169
        %p315 = pneg %p200
        %p316 = pneg %p197
        %s317 = sand.u32 %s187, 1
        %s318 = scalar_lea.sflag [#allocation3], %s317
        %s319 = sand.u32 %s187, 1
        %s320 = smul.addr %s319, 32
        %s321 = scalar_lea.vmem [#allocation7], %s320
        %p322 = scmp.lt.s32.totalorder %s26, 1
        %s323 = scalar_select %p322, %s26, 1
        %s324 = smul.addr %s323, 4
        %s325 = smul.addr %s324, 8
        %s326 = scalar_lea.vmem %s0, %s325
        %p327 = scmp.lt.s32.totalorder %s26, 1
        %s328 = scalar_select %p327, %s26, 1
        %p329 = scmp.lt.s32.totalorder %s27, 0
        %s330 = scalar_select %p329, %s27, 0
        %s331 = smul.addr %s328, 8
        %s332 = sadd.s32 %s330, %s331
        %s333 = smul.addr %s332, 4
        %s334 = scalar_lea.vmem %s1, %s333
        %p335 = scmp.lt.s32.totalorder %s27, 0
        %s336 = scalar_select %p335, %s27, 0
        %s337 = smul.addr %s336, 8
        %s338 = scalar_lea.vmem %s2, %s337
        %v339 = vld [vmem:[%s326] sm:$0xff]
        %v340 = vld [vmem:[%s326 + $0x8] sm:$0xff]
        %v341 = vld [vmem:[%s326 + $0x10] sm:$0xff]
        %v342 = vld [vmem:[%s326 + $0x18] sm:$0xff]
        %v343 = vld [vmem:[%s338] sm:$0xff]
        %v344 = vld [vmem:[%s338 + $0x8] sm:$0xff]
        %vm345 = vcmask 130048
        %v347 = vsel %vm345, %v339, 0
        %v350 = vsel %vm345, %v340, 0
        %v353 = vsel %vm345, %v341, 0
        %v356 = vsel %vm345, %v342, 0
        %358 = vmatprep.subr.mxu0 0.0
        %359 = vmatpush1.msra.mxu0 %v343
        %360 = vmatprep.subr.mxu0 0.0
        %361 = vmatpush1.msra.mxu0 %v344
        %362 = vmatprep.subr.mxu0 0.0
        %363 = vmatpush1.msra.mxu0 0.0
        %364 = vmatprep.subr.mxu0 0.0
        %365 = vmatpush1.msra.mxu0 0.0
        %366 = vmatprep.subr.mxu0 0.0
        %367 = vmatpush1.msra.mxu0 0.0
        %368 = vmatprep.subr.mxu0 0.0
        %369 = vmatpush1.msra.mxu0 0.0
        %370 = vmatprep.subr.mxu0 0.0
        %371 = vmatpush1.msra.mxu0 0.0
        %372 = vmatprep.subr.mxu0 0.0
        %373 = vmatpush1.msra.mxu0 0.0
        %374 = vmatprep.subr.mxu0 0.0
        %375 = vmatpush1.msra.mxu0 0.0
        %376 = vmatprep.subr.mxu0 0.0
        %377 = vmatpush1.msra.mxu0 0.0
        %378 = vmatprep.subr.mxu0 0.0
        %379 = vmatpush1.msra.mxu0 0.0
        %380 = vmatprep.subr.mxu0 0.0
        %381 = vmatpush1.msra.mxu0 0.0
        %382 = vmatprep.subr.mxu0 0.0
        %383 = vmatpush1.msra.mxu0 0.0
        %384 = vmatprep.subr.mxu0 0.0
        %385 = vmatpush1.msra.mxu0 0.0
        %386 = vmatprep.subr.mxu0 0.0
        %387 = vmatpush1.msra.mxu0 0.0
        %388 = vmatprep.subr.mxu0 0.0
        %389 = vmatpush1.msra.mxu0 0.0
        %390 = vmatprep.subr.mxu0 0.0
        %391 = vmatpush1.msra.mxu0 0.0
        %392 = vmatprep.subr.mxu0 0.0
        %393 = vmatpush1.msra.mxu0 0.0
        %394 = vmatprep.subr.mxu0 0.0
        %395 = vmatpush1.msra.mxu0 0.0
        %396 = vmatprep.subr.mxu0 0.0
        %397 = vmatpush1.msra.mxu0 0.0
        %398 = vmatprep.subr.mxu0 0.0
        %399 = vmatpush1.msra.mxu0 0.0
        %400 = vmatprep.subr.mxu0 0.0
        %401 = vmatpush1.msra.mxu0 0.0
        %402 = vmatprep.subr.mxu0 0.0
        %403 = vmatpush1.msra.mxu0 0.0
        %404 = vmatprep.subr.mxu0 0.0
        %405 = vmatpush1.msra.mxu0 0.0
        %406 = vmatprep.subr.mxu0 0.0
        %407 = vmatpush1.msra.mxu0 0.0
        %408 = vmatprep.subr.mxu0 0.0
        %409 = vmatpush1.msra.mxu0 0.0
        %410 = vmatprep.subr.mxu0 0.0
        %411 = vmatpush1.msra.mxu0 0.0
        %412 = vmatprep.subr.mxu0 0.0
        %413 = vmatpush1.msra.mxu0 0.0
        %414 = vmatprep.subr.mxu0 0.0
        %415 = vmatpush1.msra.mxu0 0.0
        %416 = vmatprep.subr.mxu0 0.0
        %417 = vmatpush1.msra.mxu0 0.0
        %418 = vmatprep.subr.mxu0 0.0
        %419 = vmatpush1.msra.mxu0 0.0
        %420 = vmatprep.subr.mxu0 0.0
        %421 = vmatpush1.msra.mxu0 0.0
        %422 = vmatprep.mubr.f32.mxu0 0.0
        %423 = vmatmul.mubr.f32.gmra.mrb[0].mxu0 %v347
        %v424 = vpop.f32.mrb[0].mxu0
        %v425 = vadd.f32 0.0, %v424
        %v426 = vpop.f32.mrb[0].mxu0
        %427 = vmatprep.mubr.f32.mxu0 0.0
        %428 = vmatmul.mubr.f32.gmra.mrb[0].mxu0 %v350
        %v429 = vpop.f32.mrb[0].mxu0
        %v430 = vadd.f32 0.0, %v429
        %v431 = vpop.f32.mrb[0].mxu0
        %432 = vmatprep.mubr.f32.mxu0 0.0
        %433 = vmatmul.mubr.f32.gmra.mrb[0].mxu0 %v353
        %v434 = vpop.f32.mrb[0].mxu0
        %v435 = vadd.f32 0.0, %v434
        %v436 = vpop.f32.mrb[0].mxu0
        %437 = vmatprep.mubr.f32.mxu0 0.0
        %438 = vmatmul.mubr.f32.gmra.mrb[0].mxu0 %v356
        %v439 = vpop.f32.mrb[0].mxu0
        %v440 = vadd.f32 0.0, %v439
        %v441 = vpop.f32.mrb[0].mxu0
        %442 = vdwg.mxu0
        %v443 = vld [vmem:[%s3] sm:$0xff]
        %v444 = vld [vmem:[%s3 + $0x8] sm:$0xff]
        %v445 = vld [vmem:[%s3 + $0x10] sm:$0xff]
        %v446 = vld [vmem:[%s3 + $0x18] sm:$0xff]
        %s447 = sld [smem:[#allocation5]]
        %v448 = vstv %s447
        %v450 = vsel %vm345, %v443, 0
        %v453 = vsel %vm345, %v444, 0
        %v456 = vsel %vm345, %v445, 0
        %v459 = vsel %vm345, %v446, 0
        %461 = vmatprep.subr.mxu0 0.0
        %462 = vmatpush1.msra.mxu0 %v425
        %463 = vmatprep.subr.mxu0 0.0
        %464 = vmatpush1.msra.mxu0 %v430
        %465 = vmatprep.subr.mxu0 0.0
        %466 = vmatpush1.msra.mxu0 0.0
        %467 = vmatprep.subr.mxu0 0.0
        %468 = vmatpush1.msra.mxu0 0.0
        %469 = vmatprep.subr.mxu0 0.0
        %470 = vmatpush1.msra.mxu0 0.0
        %471 = vmatprep.subr.mxu0 0.0
        %472 = vmatpush1.msra.mxu0 0.0
        %473 = vmatprep.subr.mxu0 0.0
        %474 = vmatpush1.msra.mxu0 0.0
        %475 = vmatprep.subr.mxu0 0.0
        %476 = vmatpush1.msra.mxu0 0.0
        %477 = vmatprep.subr.mxu0 0.0
        %478 = vmatpush1.msra.mxu0 0.0
        %479 = vmatprep.subr.mxu0 0.0
        %480 = vmatpush1.msra.mxu0 0.0
        %481 = vmatprep.subr.mxu0 0.0
        %482 = vmatpush1.msra.mxu0 0.0
        %483 = vmatprep.subr.mxu0 0.0
        %484 = vmatpush1.msra.mxu0 0.0
        %485 = vmatprep.subr.mxu0 0.0
        %486 = vmatpush1.msra.mxu0 0.0
        %487 = vmatprep.subr.mxu0 0.0
        %488 = vmatpush1.msra.mxu0 0.0
        %489 = vmatprep.subr.mxu0 0.0
        %490 = vmatpush1.msra.mxu0 0.0
        %491 = vmatprep.subr.mxu0 0.0
        %492 = vmatpush1.msra.mxu0 0.0
        %493 = vmatprep.subr.mxu0 0.0
        %494 = vmatpush1.msra.mxu0 0.0
        %495 = vmatprep.subr.mxu0 0.0
        %496 = vmatpush1.msra.mxu0 0.0
        %497 = vmatprep.subr.mxu0 0.0
        %498 = vmatpush1.msra.mxu0 0.0
        %499 = vmatprep.subr.mxu0 0.0
        %500 = vmatpush1.msra.mxu0 0.0
        %501 = vmatprep.subr.mxu0 0.0
        %502 = vmatpush1.msra.mxu0 0.0
        %503 = vmatprep.subr.mxu0 0.0
        %504 = vmatpush1.msra.mxu0 0.0
        %505 = vmatprep.subr.mxu0 0.0
        %506 = vmatpush1.msra.mxu0 0.0
        %507 = vmatprep.subr.mxu0 0.0
        %508 = vmatpush1.msra.mxu0 0.0
        %509 = vmatprep.subr.mxu0 0.0
        %510 = vmatpush1.msra.mxu0 0.0
        %511 = vmatprep.subr.mxu0 0.0
        %512 = vmatpush1.msra.mxu0 0.0
        %513 = vmatprep.subr.mxu0 0.0
        %514 = vmatpush1.msra.mxu0 0.0
        %515 = vmatprep.subr.mxu0 0.0
        %516 = vmatpush1.msra.mxu0 0.0
        %517 = vmatprep.subr.mxu0 0.0
        %518 = vmatpush1.msra.mxu0 0.0
        %519 = vmatprep.subr.mxu0 0.0
        %520 = vmatpush1.msra.mxu0 0.0
        %521 = vmatprep.subr.mxu0 0.0
        %522 = vmatpush1.msra.mxu0 0.0
        %523 = vmatprep.subr.mxu0 0.0
        %524 = vmatpush1.msra.mxu0 0.0
        %525 = vmatprep.mubr.f32.mxu0 0.0
        %526 = vmatmul.mubr.f32.gmra.mrb[0].mxu0 %v450
        %v527 = vpop.f32.mrb[0].mxu0
        %v528 = vadd.f32 %v448, %v527
        %v529 = vpop.f32.mrb[0].mxu0
        %530 = vmatprep.mubr.f32.mxu0 0.0
        %531 = vmatmul.mubr.f32.gmra.mrb[0].mxu0 %v453
        %v532 = vpop.f32.mrb[0].mxu0
        %v533 = vadd.f32 %v448, %v532
        %v534 = vpop.f32.mrb[0].mxu0
        %535 = vmatprep.mubr.f32.mxu0 0.0
        %536 = vmatmul.mubr.f32.gmra.mrb[0].mxu0 %v456
        %v537 = vpop.f32.mrb[0].mxu0
        %v538 = vadd.f32 %v448, %v537
        %v539 = vpop.f32.mrb[0].mxu0
        %540 = vmatprep.mubr.f32.mxu0 0.0
        %541 = vmatmul.mubr.f32.gmra.mrb[0].mxu0 %v459
        %v542 = vpop.f32.mrb[0].mxu0
        %v543 = vadd.f32 %v448, %v542
        %v544 = vpop.f32.mrb[0].mxu0
        %545 = vdwg.mxu0
        %s546 = sld [smem:[#allocation2]]
        %v547 = vld [vmem:[%s334] sm:$0xf]
        %v548 = vld [vmem:[%s334 + $0x4] sm:$0xf]
        %v549 = vld [vmem:[%s334 + $0x8] sm:$0xf]
        %v550 = vld [vmem:[%s334 + $0xc] sm:$0xf]
        %v551 = vunpack.c.l.bf16 %v547
        %v552 = vunpack.c.l.bf16 %v548
        %v553 = vunpack.c.l.bf16 %v549
        %v554 = vunpack.c.l.bf16 %v550
        %v555 = vstv %s546
        %v556 = vmul.f32 %v555, %v551
        %v557 = vmul.f32 %v555, %v552
        %v558 = vmul.f32 %v555, %v553
        %v559 = vmul.f32 %v555, %v554
        %v560 = vadd.f32 %v528, %v556
        %v561 = vadd.f32 %v533, %v557
        %v562 = vadd.f32 %v538, %v558
        %v563 = vadd.f32 %v543, %v559
        %s564 = sld [smem:[#allocation2 + $0x1]]
        %s565 = scalar_lea.vmem %s334, 16
        %v566 = vld [vmem:[%s565] sm:$0xf]
        %v567 = vld [vmem:[%s565 + $0x4] sm:$0xf]
        %v568 = vld [vmem:[%s565 + $0x8] sm:$0xf]
        %v569 = vld [vmem:[%s565 + $0xc] sm:$0xf]
        %v570 = vunpack.c.l.bf16 %v566
        %v571 = vunpack.c.l.bf16 %v567
        %v572 = vunpack.c.l.bf16 %v568
        %v573 = vunpack.c.l.bf16 %v569
        %v574 = vstv %s564
        %v575 = vmul.f32 %v574, %v570
        %v576 = vmul.f32 %v574, %v571
        %v577 = vmul.f32 %v574, %v572
        %v578 = vmul.f32 %v574, %v573
        %v579 = vadd.f32 %v560, %v575
        %v580 = vadd.f32 %v561, %v576
        %v581 = vadd.f32 %v562, %v577
        %v582 = vadd.f32 %v563, %v578
        %v583 = vpack.c.bf16 %v580, %v579
        %v584 = vpack.c.bf16 %v582, %v581
        %v587 = vunpack.c.l.b16 %v583
        %v588 = vunpack.c.h.b16 %v583
        %v589 = vunpack.c.l.b16 %v584
        %v590 = vunpack.c.h.b16 %v584
        %v591 = vpack.c.b16 %v587, %v587
        %v592 = vpack.c.b16 %v588, %v588
        %v593 = vpack.c.b16 %v589, %v589
        %v594 = vpack.c.b16 %v590, %v590
        %vm599 = vcmask 257024
        %600 = vst.msk [vmem:[%s321] sm:$0xf] %vm599, %v591
        %601 = vst.msk [vmem:[%s321 + $0x4] sm:$0xf] %vm599, %v592
        %602 = vst.msk [vmem:[%s321 + $0x8] sm:$0xf] %vm599, %v593
        %603 = vst.msk [vmem:[%s321 + $0xc] sm:$0xf] %vm599, %v594
        %s604 = sld [smem:[#allocation5 + $0x1]]
        %v605 = vstv %s604
        %606 = vmatprep.subr.mxu0 0.0
        %607 = vmatpush1.msra.mxu0 %v435
        %608 = vmatprep.subr.mxu0 0.0
        %609 = vmatpush1.msra.mxu0 %v440
        %610 = vmatprep.subr.mxu0 0.0
        %611 = vmatpush1.msra.mxu0 0.0
        %612 = vmatprep.subr.mxu0 0.0
        %613 = vmatpush1.msra.mxu0 0.0
        %614 = vmatprep.subr.mxu0 0.0
        %615 = vmatpush1.msra.mxu0 0.0
        %616 = vmatprep.subr.mxu0 0.0
        %617 = vmatpush1.msra.mxu0 0.0
        %618 = vmatprep.subr.mxu0 0.0
        %619 = vmatpush1.msra.mxu0 0.0
        %620 = vmatprep.subr.mxu0 0.0
        %621 = vmatpush1.msra.mxu0 0.0
        %622 = vmatprep.subr.mxu0 0.0
        %623 = vmatpush1.msra.mxu0 0.0
        %624 = vmatprep.subr.mxu0 0.0
        %625 = vmatpush1.msra.mxu0 0.0
        %626 = vmatprep.subr.mxu0 0.0
        %627 = vmatpush1.msra.mxu0 0.0
        %628 = vmatprep.subr.mxu0 0.0
        %629 = vmatpush1.msra.mxu0 0.0
        %630 = vmatprep.subr.mxu0 0.0
        %631 = vmatpush1.msra.mxu0 0.0
        %632 = vmatprep.subr.mxu0 0.0
        %633 = vmatpush1.msra.mxu0 0.0
        %634 = vmatprep.subr.mxu0 0.0
        %635 = vmatpush1.msra.mxu0 0.0
        %636 = vmatprep.subr.mxu0 0.0
        %637 = vmatpush1.msra.mxu0 0.0
        %638 = vmatprep.subr.mxu0 0.0
        %639 = vmatpush1.msra.mxu0 0.0
        %640 = vmatprep.subr.mxu0 0.0
        %641 = vmatpush1.msra.mxu0 0.0
        %642 = vmatprep.subr.mxu0 0.0
        %643 = vmatpush1.msra.mxu0 0.0
        %644 = vmatprep.subr.mxu0 0.0
        %645 = vmatpush1.msra.mxu0 0.0
        %646 = vmatprep.subr.mxu0 0.0
        %647 = vmatpush1.msra.mxu0 0.0
        %648 = vmatprep.subr.mxu0 0.0
        %649 = vmatpush1.msra.mxu0 0.0
        %650 = vmatprep.subr.mxu0 0.0
        %651 = vmatpush1.msra.mxu0 0.0
        %652 = vmatprep.subr.mxu0 0.0
        %653 = vmatpush1.msra.mxu0 0.0
        %654 = vmatprep.subr.mxu0 0.0
        %655 = vmatpush1.msra.mxu0 0.0
        %656 = vmatprep.subr.mxu0 0.0
        %657 = vmatpush1.msra.mxu0 0.0
        %658 = vmatprep.subr.mxu0 0.0
        %659 = vmatpush1.msra.mxu0 0.0
        %660 = vmatprep.subr.mxu0 0.0
        %661 = vmatpush1.msra.mxu0 0.0
        %662 = vmatprep.subr.mxu0 0.0
        %663 = vmatpush1.msra.mxu0 0.0
        %664 = vmatprep.subr.mxu0 0.0
        %665 = vmatpush1.msra.mxu0 0.0
        %666 = vmatprep.subr.mxu0 0.0
        %667 = vmatpush1.msra.mxu0 0.0
        %668 = vmatprep.subr.mxu0 0.0
        %669 = vmatpush1.msra.mxu0 0.0
        %670 = vmatprep.mubr.f32.mxu0 0.0
        %671 = vmatmul.mubr.f32.gmra.mrb[0].mxu0 %v450
        %v672 = vpop.f32.mrb[0].mxu0
        %v673 = vadd.f32 %v605, %v672
        %v674 = vpop.f32.mrb[0].mxu0
        %675 = vmatprep.mubr.f32.mxu0 0.0
        %676 = vmatmul.mubr.f32.gmra.mrb[0].mxu0 %v453
        %v677 = vpop.f32.mrb[0].mxu0
        %v678 = vadd.f32 %v605, %v677
        %v679 = vpop.f32.mrb[0].mxu0
        %680 = vmatprep.mubr.f32.mxu0 0.0
        %681 = vmatmul.mubr.f32.gmra.mrb[0].mxu0 %v456
        %v682 = vpop.f32.mrb[0].mxu0
        %v683 = vadd.f32 %v605, %v682
        %v684 = vpop.f32.mrb[0].mxu0
        %685 = vmatprep.mubr.f32.mxu0 0.0
        %686 = vmatmul.mubr.f32.gmra.mrb[0].mxu0 %v459
        %v687 = vpop.f32.mrb[0].mxu0
        %v688 = vadd.f32 %v605, %v687
        %v689 = vpop.f32.mrb[0].mxu0
        %690 = vdwg.mxu0
        %s691 = sld [smem:[#allocation2 + $0x80]]
        %v692 = vld [vmem:[%s334] sm:$0xf]
        %v693 = vld [vmem:[%s334 + $0x4] sm:$0xf]
        %v694 = vld [vmem:[%s334 + $0x8] sm:$0xf]
        %v695 = vld [vmem:[%s334 + $0xc] sm:$0xf]
        %v696 = vunpack.c.l.bf16 %v692
        %v697 = vunpack.c.l.bf16 %v693
        %v698 = vunpack.c.l.bf16 %v694
        %v699 = vunpack.c.l.bf16 %v695
        %v700 = vstv %s691
        %v701 = vmul.f32 %v700, %v696
        %v702 = vmul.f32 %v700, %v697
        %v703 = vmul.f32 %v700, %v698
        %v704 = vmul.f32 %v700, %v699
        %v705 = vadd.f32 %v673, %v701
        %v706 = vadd.f32 %v678, %v702
        %v707 = vadd.f32 %v683, %v703
        %v708 = vadd.f32 %v688, %v704
        %s709 = sld [smem:[#allocation2 + $0x81]]
        %v710 = vld [vmem:[%s565] sm:$0xf]
        %v711 = vld [vmem:[%s565 + $0x4] sm:$0xf]
        %v712 = vld [vmem:[%s565 + $0x8] sm:$0xf]
        %v713 = vld [vmem:[%s565 + $0xc] sm:$0xf]
        %v714 = vunpack.c.l.bf16 %v710
        %v715 = vunpack.c.l.bf16 %v711
        %v716 = vunpack.c.l.bf16 %v712
        %v717 = vunpack.c.l.bf16 %v713
        %v718 = vstv %s709
        %v719 = vmul.f32 %v718, %v714
        %v720 = vmul.f32 %v718, %v715
        %v721 = vmul.f32 %v718, %v716
        %v722 = vmul.f32 %v718, %v717
        %v723 = vadd.f32 %v705, %v719
        %v724 = vadd.f32 %v706, %v720
        %v725 = vadd.f32 %v707, %v721
        %v726 = vadd.f32 %v708, %v722
        %v727 = vpack.c.bf16 %v724, %v723
        %v728 = vpack.c.bf16 %v726, %v725
        %v731 = vunpack.c.l.b16 %v727
        %v732 = vunpack.c.h.b16 %v727
        %v733 = vunpack.c.l.b16 %v728
        %v734 = vunpack.c.h.b16 %v728
        %v735 = vpack.c.b16 %v731, %v731
        %v736 = vpack.c.b16 %v732, %v732
        %v737 = vpack.c.b16 %v733, %v733
        %v738 = vpack.c.b16 %v734, %v734
        %s743 = scalar_lea.vmem %s321, 16 [#allocation7]
        %744 = vst.msk [vmem:[%s743] sm:$0xf] %vm599, %v735
        %745 = vst.msk [vmem:[%s743 + $0x4] sm:$0xf] %vm599, %v736
        %746 = vst.msk [vmem:[%s743 + $0x8] sm:$0xf] %vm599, %v737
        %747 = vst.msk [vmem:[%s743 + $0xc] sm:$0xf] %vm599, %v738
        %s748 = sand.u32 %s187, 1
        %s749 = scalar_lea.sflag [#allocation3], %s748
        %s750 = sand.u32 %s187, 1
        %s751 = smul.addr %s750, 32
        %s752 = scalar_lea.vmem [#allocation7], %s751
        // Predicated region
        $region53: #{mc_upsample_forward.3} parent=43 // pred_check
          %p753 = pneg %p197
        $region54: #{mc_upsample_forward.3} parent=43 // pred_check_branch
          %755 = sbr.rel (%p753) target = $region56
        $region55: #{mc_upsample_forward.3} parent=43 // pred_region
          %s757 = ssub.s32 512, 512
          %758 = vsyncadd %s749, %s757
          %s759 = smul.addr %s26, 8
          %s760 = sadd.s32 %s27, %s759
          %s761 = smul.addr %s760, 64
          %s762 = scalar_lea.hbm %s6, %s761
          %s763 = sshll.u32 %s752, 4
          %s764 = int_to_ptr.vmem [resolvable:$true] %s763
          %769 = dma.vmem_to_hbm [thread:$0]  %s764, 512, %s762, %s749, 64, 64, 4
        $region56: #{mc_upsample_forward.3} parent=43 // pred_fallthru
          _
      $region44: #{mc_upsample_forward.3} parent=5 // pred_fallthru
        _
      %p770 = scmp.le.s32.totalorder 2, %s17
      // Predicated region
      $region57: #{mc_upsample_forward.3} parent=5 // pred_check
        %p771 = pneg %p770
      $region58: #{mc_upsample_forward.3} parent=5 // pred_check_branch
        %773 = sbr.rel (%p771) target = $region60
      $region59: #{mc_upsample_forward.3} parent=5 // pred_region
        %s774 = ssub.s32 %s17, 2
        // Predicated region
        $region61: #{mc_upsample_forward.3} parent=59 // pred_check
          %p775 = pneg %p203
        $region62: #{mc_upsample_forward.3} parent=59 // pred_check_branch
          %777 = sbr.rel (%p775) target = $region64
        $region63: #{mc_upsample_forward.3} parent=59 // pred_region
          %s778 = sand.u32 %s188, 1
          %s779 = scalar_lea.sflag [#allocation3], %s778
          %s780 = sand.u32 %s188, 1
          %s781 = smul.addr %s780, 32
          %s782 = scalar_lea.vmem [#allocation7], %s781
          %783 = dma.done %s779, 512
        $region64: #{mc_upsample_forward.3} parent=59 // pred_fallthru
          _
      $region60: #{mc_upsample_forward.3} parent=5 // pred_fallthru
        _
    $region6: #{mc_upsample_forward.3} parent=1 // loop_footer
      %s21 = sadd.s32 1, %s17
    $region7: #{mc_upsample_forward.3} parent=1 // loop_footer_branch
      %16 = sbr.rel target = $region3
    $region8: #{mc_upsample_forward.3} parent=1 // loop_exit
      _
    %784 = vsyncpa [#allocation3], 1
    %s785 = scalar_lea.sflag [#allocation3], 1
    %786 = vsyncpa %s785, 1
    %787 = vsyncpa [#allocation4], 1
    %s788 = scalar_lea.sflag [#allocation4], 1
    %789 = vsyncpa %s788, 1
    %790 = vsyncpa [#allocation6], 1

</llo_original>
